<compile_context>
chip_gen: v7x
topology: tpu7x:2x2x1
jax: 0.10.0
libtpu: 0.0.40
codegen_flags: <defaults>
</compile_context>

<pallas_src>
import jax
import jax.numpy as jnp
from jax.experimental import pallas as pl
from jax.experimental.pallas import tpu as pltpu


def _round_up(x, m):
    return ((x + m - 1) // m) * m


# ---------------------------------------------------------------------------
# Pallas kernels
# ---------------------------------------------------------------------------
def conv_relu_pool_kernel(a_ref, w_ref, b_ref, o_ref):
    """Fused conv(im2col matmul) + 2x2 maxpool + bias + ReLU.

    a_ref : (4, TILE_M, K)  bf16  -- the four pooling-window quadrants
    w_ref : (K, Cout_p)     bf16  -- resident across the row grid
    b_ref : (1, Cout_p)     f32
    o_ref : (TILE_M, Cout_p) f32
    """
    q, tm, k = a_ref.shape
    a = a_ref[...].reshape(q * tm, k)                      # one tall matmul operand
    y = jnp.dot(a, w_ref[...], preferred_element_type=jnp.float32)   # (4*TILE_M, Cout_p)
    y = y.reshape(q, tm, -1)
    y = jnp.max(y, axis=0) + b_ref[...]                    # maxpool, then bias once
    o_ref[...] = jnp.maximum(y, 0.0)                       # ReLU once


def mlp_kernel(x_ref, w1_ref, b1_ref, w2_ref, b2_ref, w3_ref, b3_ref, o_ref):
    """Classifier: [Dropout] Linear ReLU [Dropout] Linear ReLU Linear.

    Dropout is identity in inference mode.
    # TODO(synk): training-mode dropout (p=0.3) would need pltpu PRNG; omitted.
    """
    h = jnp.dot(x_ref[...], w1_ref[...], preferred_element_type=jnp.float32) + b1_ref[...]
    h = jnp.maximum(h, 0.0).astype(w2_ref.dtype)
    h = jnp.dot(h, w2_ref[...], preferred_element_type=jnp.float32) + b2_ref[...]
    h = jnp.maximum(h, 0.0).astype(w3_ref.dtype)
    o_ref[...] = jnp.dot(h, w3_ref[...], preferred_element_type=jnp.float32) + b3_ref[...]


# ---------------------------------------------------------------------------
# Host-side glue (patch extraction / padding) + pallas_call wrappers
# ---------------------------------------------------------------------------
def conv_relu_maxpool(x_nhwc, w_oihw, b, ks=5, tile_m=512):
    """x_nhwc: (N,H,W,Cin) f32; w_oihw: (Cout,Cin,ks,ks); b: (Cout,) -> (N,H/2,W/2,Cout) f32."""
    N, H, W, Cin = x_nhwc.shape
    Cout = w_oihw.shape[0]
    pad = (ks - 1) // 2

    xp = jnp.pad(x_nhwc, ((0, 0), (pad, pad), (pad, pad), (0, 0)))
    cols = [xp[:, kh:kh + H, kw:kw + W, :] for kh in range(ks) for kw in range(ks)]
    patches = jnp.concatenate(cols, axis=-1)               # (N,H,W,ks*ks*Cin), (kh,kw,cin) order
    K = ks * ks * Cin
    Hh, Wh = H // 2, W // 2
    M = N * Hh * Wh

    p = patches.reshape(N, Hh, 2, Wh, 2, K)
    quads = jnp.stack(
        [p[:, :, i, :, j, :].reshape(M, K) for i in range(2) for j in range(2)], axis=0
    )                                                      # (4, M, K)

    # Padded dims: K -> multiple of 8 (sublane), Cout -> multiple of 128 (lane-dense output)
    K_p = _round_up(K, 8)
    C_p = _round_up(Cout, 128)

    w_mat = jnp.transpose(w_oihw, (2, 3, 1, 0)).reshape(K, Cout)    # (kh,kw,cin) x cout
    if K_p > K:
        quads = jnp.pad(quads, ((0, 0), (0, 0), (0, K_p - K)))
        w_mat = jnp.pad(w_mat, ((0, K_p - K), (0, 0)))
    if C_p > Cout:
        w_mat = jnp.pad(w_mat, ((0, 0), (0, C_p - Cout)))
        b_vec = jnp.pad(b, (0, C_p - Cout))
    else:
        b_vec = b
    b_mat = b_vec.reshape(1, C_p).astype(jnp.float32)

    # Row tiling: TILE_M rows per grid step, weights stay resident.
    tm = min(tile_m, _round_up(M, 8))
    M_p = _round_up(M, tm)
    if M_p > M:
        quads = jnp.pad(quads, ((0, 0), (0, M_p - M), (0, 0)))

    quads_bf = quads.astype(jnp.bfloat16)
    w_bf = w_mat.astype(jnp.bfloat16)

    grid = (M_p // tm,)
    cost = pl.CostEstimate(
        flops=2 * 4 * M_p * K_p * C_p,
        transcendentals=0,
        bytes_accessed=quads_bf.size * 2 + w_bf.size * 2 + b_mat.size * 4 + M_p * C_p * 4,
    )

    out = pl.pallas_call(
        conv_relu_pool_kernel,
        out_shape=jax.ShapeDtypeStruct((M_p, C_p), jnp.float32),
        grid=grid,
        in_specs=[
            pl.BlockSpec((4, tm, K_p), lambda i: (0, i, 0)),     # quadrant tiles
            pl.BlockSpec((K_p, C_p), lambda i: (0, 0)),          # weights (resident)
            pl.BlockSpec((1, C_p), lambda i: (0, 0)),            # bias (resident)
        ],
        out_specs=pl.BlockSpec((tm, C_p), lambda i: (i, 0)),
        compiler_params=pltpu.CompilerParams(dimension_semantics=("parallel",)),
        cost_estimate=cost,
    )(quads_bf, w_bf, b_mat)

    out = out[:M, :Cout]
    return out.reshape(N, Hh, Wh, Cout)


def classifier_mlp(x_flat, w1, b1, w2, b2, w3, b3, tile_n=256):
    """x_flat: (N, Din) f32.  PyTorch Linear weights are (out, in) -> transposed here."""
    N, Din = x_flat.shape
    C = w3.shape[0]
    C_p = _round_up(C, 128)

    wt1 = w1.T.astype(jnp.bfloat16)                        # (Din, 128)
    wt2 = w2.T.astype(jnp.bfloat16)                        # (128, 256)
    wt3 = w3.T                                             # (256, C)
    if C_p > C:
        wt3 = jnp.pad(wt3, ((0, 0), (0, C_p - C)))
        b3p = jnp.pad(b3, (0, C_p - C))
    else:
        b3p = b3
    wt3 = wt3.astype(jnp.bfloat16)
    bm1 = b1.reshape(1, -1).astype(jnp.float32)
    bm2 = b2.reshape(1, -1).astype(jnp.float32)
    bm3 = b3p.reshape(1, C_p).astype(jnp.float32)

    # Pad batch to a sublane multiple and tile over it (weights resident).
    tn = min(tile_n, _round_up(N, 8))
    N_p = _round_up(N, tn)
    x_p = jnp.pad(x_flat, ((0, N_p - N), (0, 0))).astype(jnp.bfloat16)

    H1, H2 = wt1.shape[1], wt2.shape[1]
    grid = (N_p // tn,)
    cost = pl.CostEstimate(
        flops=2 * N_p * (Din * H1 + H1 * H2 + H2 * C_p),
        transcendentals=0,
        bytes_accessed=x_p.size * 2 + (wt1.size + wt2.size + wt3.size) * 2 + N_p * C_p * 4,
    )

    out = pl.pallas_call(
        mlp_kernel,
        out_shape=jax.ShapeDtypeStruct((N_p, C_p), jnp.float32),
        grid=grid,
        in_specs=[
            pl.BlockSpec((tn, Din), lambda i: (i, 0)),
            pl.BlockSpec((Din, H1), lambda i: (0, 0)),
            pl.BlockSpec((1, H1), lambda i: (0, 0)),
            pl.BlockSpec((H1, H2), lambda i: (0, 0)),
            pl.BlockSpec((1, H2), lambda i: (0, 0)),
            pl.BlockSpec((H2, C_p), lambda i: (0, 0)),
            pl.BlockSpec((1, C_p), lambda i: (0, 0)),
        ],
        out_specs=pl.BlockSpec((tn, C_p), lambda i: (i, 0)),
        compiler_params=pltpu.CompilerParams(dimension_semantics=("parallel",)),
        cost_estimate=cost,
    )(x_p, wt1, bm1, wt2, bm2, wt3, bm3)

    return out[:N, :C]


# ---------------------------------------------------------------------------
# TP1CNN model
# ---------------------------------------------------------------------------
def init_tp1cnn_params(key, images_size=16, nb_class=86):
    c1, c2, c3 = images_size // 4, images_size // 2, images_size
    feat_dim = c3 * (images_size // 8) ** 2     # == probe_tensor flatten size
    ks = jax.random.split(key, 12)

    def nrm(k, shape, scale=0.05):
        return scale * jax.random.normal(k, shape, jnp.float32)

    params = {
        "conv1_w": nrm(ks[0], (c1, 1, 5, 5)),   "conv1_b": nrm(ks[1], (c1,)),
        "conv2_w": nrm(ks[2], (c2, c1, 5, 5)),  "conv2_b": nrm(ks[3], (c2,)),
        "conv3_w": nrm(ks[4], (c3, c2, 5, 5)),  "conv3_b": nrm(ks[5], (c3,)),
        "fc1_w": nrm(ks[6], (128, feat_dim)),   "fc1_b": nrm(ks[7], (128,)),
        "fc2_w": nrm(ks[8], (256, 128)),        "fc2_b": nrm(ks[9], (256,)),
        "fc3_w": nrm(ks[10], (nb_class, 256)),  "fc3_b": nrm(ks[11], (nb_class,)),
    }
    return params


def tp1cnn_forward(params, x_nchw):
    """x_nchw: (N, 1, H, W) float32  ->  logits (N, nb_class)."""
    x = jnp.transpose(x_nchw, (0, 2, 3, 1))                       # NCHW -> NHWC
    x = conv_relu_maxpool(x, params["conv1_w"], params["conv1_b"])
    x = conv_relu_maxpool(x, params["conv2_w"], params["conv2_b"])
    x = conv_relu_maxpool(x, params["conv3_w"], params["conv3_b"])
    # PyTorch x.view(N, -1) flattens NCHW => (C, H, W) order
    x = jnp.transpose(x, (0, 3, 1, 2)).reshape(x.shape[0], -1)
    y = classifier_mlp(x, params["fc1_w"], params["fc1_b"],
                       params["fc2_w"], params["fc2_b"],
                       params["fc3_w"], params["fc3_b"])
    return y


if __name__ == "__main__":
    IMAGES_SIZE = 16     # small shape consistent with the module (default 64)
    NB_CLASS = 86
    BATCH = 2

    key = jax.random.PRNGKey(0)
    pkey, xkey = jax.random.split(key)
    params = init_tp1cnn_params(pkey, images_size=IMAGES_SIZE, nb_class=NB_CLASS)
    x = jax.random.normal(xkey, (BATCH, 1, IMAGES_SIZE, IMAGES_SIZE), jnp.float32)

    logits = jax.jit(tp1cnn_forward)(params, x)
    jax.block_until_ready(logits)
    assert logits.shape == (BATCH, NB_CLASS), logits.shape
    assert logits.dtype == jnp.float32
    print("KERNEL_OK")
</pallas_src>

<mosaic_0001>
module attributes {stable_mosaic.version = 11 : i64} {
  func.func @conv_relu_pool_kernel(%arg0: i32, %arg1: memref<4x128x32xbf16, #tpu.memory_space<vmem>>, %arg2: memref<32x128xbf16, #tpu.memory_space<vmem>>, %arg3: memref<1x128xf32, #tpu.memory_space<vmem>>, %arg4: memref<128x128xf32, #tpu.memory_space<vmem>>) attributes {dimension_semantics = [#tpu.dimension_semantics<parallel>], iteration_bounds = array<i64: 1>, scalar_prefetch = 0 : i64, scratch_operands = 0 : i64, tpu.core_type = #tpu.core_type<tc>, window_params = [{transform_indices = @transform_0, window_bounds = array<i64: 4, 128, 32>}, {pipeline_mode = #tpu.pipeline_mode<synchronous>, transform_indices = @transform_1, window_bounds = array<i64: 32, 128>}, {pipeline_mode = #tpu.pipeline_mode<synchronous>, transform_indices = @transform_2, window_bounds = array<i64: 1, 128>}, {transform_indices = @transform_3, window_bounds = array<i64: 128, 128>}]} {
    %c0 = arith.constant 0 : index
    %c0_0 = arith.constant 0 : index
    %c0_1 = arith.constant 0 : index
    %0 = vector.load %arg1[%c0, %c0_0, %c0_1] : memref<4x128x32xbf16, #tpu.memory_space<vmem>>, vector<4x128x32xbf16>
    %1 = vector.shape_cast %0 : vector<4x128x32xbf16> to vector<512x32xbf16>
    %c0_2 = arith.constant 0 : index
    %c0_3 = arith.constant 0 : index
    %2 = vector.load %arg2[%c0_2, %c0_3] : memref<32x128xbf16, #tpu.memory_space<vmem>>, vector<32x128xbf16>
    %cst = arith.constant dense<0.000000e+00> : vector<512x128xf32>
    %3 = tpu.matmul %1, %2, %cst {dimension_numbers = #tpu.dot_dimension_numbers<[1], [0], [0], [1], [0, 0, 1, 1], [], []>} : vector<512x32xbf16>, vector<32x128xbf16>, vector<512x128xf32> -> vector<512x128xf32>
    %4 = vector.shape_cast %3 : vector<512x128xf32> to vector<4x128x128xf32>
    %cst_4 = arith.constant dense<0xFF800000> : vector<128x128xf32>
    %5 = vector.multi_reduction <maximumf>, %4, %cst_4 [0] : vector<4x128x128xf32> to vector<128x128xf32>
    %c0_5 = arith.constant 0 : index
    %c0_6 = arith.constant 0 : index
    %6 = vector.load %arg3[%c0_5, %c0_6] : memref<1x128xf32, #tpu.memory_space<vmem>>, vector<1x128xf32>
    %7 = vector.broadcast %6 : vector<1x128xf32> to vector<128x128xf32>
    %8 = arith.addf %5, %7 : vector<128x128xf32>
    %cst_7 = arith.constant 0.000000e+00 : f32
    %9 = vector.broadcast %cst_7 : f32 to vector<128x128xf32>
    %10 = arith.maximumf %8, %9 : vector<128x128xf32>
    %c0_8 = arith.constant 0 : index
    %c0_9 = arith.constant 0 : index
    %11 = vector.load %arg4[%c0_8, %c0_9] : memref<128x128xf32, #tpu.memory_space<vmem>>, vector<128x128xf32>
    tpu.vector_store %arg4[%c0_8, %c0_9], %10 {strides = array<i32>} : memref<128x128xf32, #tpu.memory_space<vmem>>, vector<128x128xf32>,
    return
  }
  func.func @transform_0(%arg0: i32) -> (i32, i32, i32) {
    %c0_i32 = arith.constant 0 : i32
    %c0_i32_0 = arith.constant 0 : i32
    %c0_i32_1 = arith.constant 0 : i32
    return %c0_i32, %arg0, %c0_i32_0 : i32, i32, i32
  }
  func.func @transform_1(%arg0: i32) -> (i32, i32) {
    %c0_i32 = arith.constant 0 : i32
    %c0_i32_0 = arith.constant 0 : i32
    %c0_i32_1 = arith.constant 0 : i32
    return %c0_i32, %c0_i32_0 : i32, i32
  }
  func.func @transform_2(%arg0: i32) -> (i32, i32) {
    %c0_i32 = arith.constant 0 : i32
    %c0_i32_0 = arith.constant 0 : i32
    %c0_i32_1 = arith.constant 0 : i32
    return %c0_i32, %c0_i32_0 : i32, i32
  }
  func.func @transform_3(%arg0: i32) -> (i32, i32) {
    %c0_i32 = arith.constant 0 : i32
    %c0_i32_0 = arith.constant 0 : i32
    return %arg0, %c0_i32 : i32, i32
  }
}

module attributes {stable_mosaic.version = 11 : i64} {
  func.func @conv_relu_pool_kernel(%arg0: i32, %arg1: memref<4x32x104xbf16, #tpu.memory_space<vmem>>, %arg2: memref<104x128xbf16, #tpu.memory_space<vmem>>, %arg3: memref<1x128xf32, #tpu.memory_space<vmem>>, %arg4: memref<32x128xf32, #tpu.memory_space<vmem>>) attributes {dimension_semantics = [#tpu.dimension_semantics<parallel>], iteration_bounds = array<i64: 1>, scalar_prefetch = 0 : i64, scratch_operands = 0 : i64, tpu.core_type = #tpu.core_type<tc>, window_params = [{transform_indices = @transform_0, window_bounds = array<i64: 4, 32, 104>}, {pipeline_mode = #tpu.pipeline_mode<synchronous>, transform_indices = @transform_1, window_bounds = array<i64: 104, 128>}, {pipeline_mode = #tpu.pipeline_mode<synchronous>, transform_indices = @transform_2, window_bounds = array<i64: 1, 128>}, {transform_indices = @transform_3, window_bounds = array<i64: 32, 128>}]} {
    %c0 = arith.constant 0 : index
    %c0_0 = arith.constant 0 : index
    %c0_1 = arith.constant 0 : index
    %0 = vector.load %arg1[%c0, %c0_0, %c0_1] : memref<4x32x104xbf16, #tpu.memory_space<vmem>>, vector<4x32x104xbf16>
    %1 = vector.shape_cast %0 : vector<4x32x104xbf16> to vector<128x104xbf16>
    %c0_2 = arith.constant 0 : index
    %c0_3 = arith.constant 0 : index
    %2 = vector.load %arg2[%c0_2, %c0_3] : memref<104x128xbf16, #tpu.memory_space<vmem>>, vector<104x128xbf16>
    %cst = arith.constant dense<0.000000e+00> : vector<128x128xf32>
    %3 = tpu.matmul %1, %2, %cst {dimension_numbers = #tpu.dot_dimension_numbers<[1], [0], [0], [1], [0, 0, 1, 1], [], []>} : vector<128x104xbf16>, vector<104x128xbf16>, vector<128x128xf32> -> vector<128x128xf32>
    %4 = vector.shape_cast %3 : vector<128x128xf32> to vector<4x32x128xf32>
    %cst_4 = arith.constant dense<0xFF800000> : vector<32x128xf32>
    %5 = vector.multi_reduction <maximumf>, %4, %cst_4 [0] : vector<4x32x128xf32> to vector<32x128xf32>
    %c0_5 = arith.constant 0 : index
    %c0_6 = arith.constant 0 : index
    %6 = vector.load %arg3[%c0_5, %c0_6] : memref<1x128xf32, #tpu.memory_space<vmem>>, vector<1x128xf32>
    %7 = vector.broadcast %6 : vector<1x128xf32> to vector<32x128xf32>
    %8 = arith.addf %5, %7 : vector<32x128xf32>
    %cst_7 = arith.constant 0.000000e+00 : f32
    %9 = vector.broadcast %cst_7 : f32 to vector<32x128xf32>
    %10 = arith.maximumf %8, %9 : vector<32x128xf32>
    %c0_8 = arith.constant 0 : index
    %c0_9 = arith.constant 0 : index
    %11 = vector.load %arg4[%c0_8, %c0_9] : memref<32x128xf32, #tpu.memory_space<vmem>>, vector<32x128xf32>
    tpu.vector_store %arg4[%c0_8, %c0_9], %10 {strides = array<i32>} : memref<32x128xf32, #tpu.memory_space<vmem>>, vector<32x128xf32>,
    return
  }
  func.func @transform_0(%arg0: i32) -> (i32, i32, i32) {
    %c0_i32 = arith.constant 0 : i32
    %c0_i32_0 = arith.constant 0 : i32
    %c0_i32_1 = arith.constant 0 : i32
    return %c0_i32, %arg0, %c0_i32_0 : i32, i32, i32
  }
  func.func @transform_1(%arg0: i32) -> (i32, i32) {
    %c0_i32 = arith.constant 0 : i32
    %c0_i32_0 = arith.constant 0 : i32
    %c0_i32_1 = arith.constant 0 : i32
    return %c0_i32, %c0_i32_0 : i32, i32
  }
  func.func @transform_2(%arg0: i32) -> (i32, i32) {
    %c0_i32 = arith.constant 0 : i32
    %c0_i32_0 = arith.constant 0 : i32
    %c0_i32_1 = arith.constant 0 : i32
    return %c0_i32, %c0_i32_0 : i32, i32
  }
  func.func @transform_3(%arg0: i32) -> (i32, i32) {
    %c0_i32 = arith.constant 0 : i32
    %c0_i32_0 = arith.constant 0 : i32
    return %arg0, %c0_i32 : i32, i32
  }
}

module attributes {stable_mosaic.version = 11 : i64} {
  func.func @conv_relu_pool_kernel(%arg0: i32, %arg1: memref<4x8x200xbf16, #tpu.memory_space<vmem>>, %arg2: memref<200x128xbf16, #tpu.memory_space<vmem>>, %arg3: memref<1x128xf32, #tpu.memory_space<vmem>>, %arg4: memref<8x128xf32, #tpu.memory_space<vmem>>) attributes {dimension_semantics = [#tpu.dimension_semantics<parallel>], iteration_bounds = array<i64: 1>, scalar_prefetch = 0 : i64, scratch_operands = 0 : i64, tpu.core_type = #tpu.core_type<tc>, window_params = [{transform_indices = @transform_0, window_bounds = array<i64: 4, 8, 200>}, {pipeline_mode = #tpu.pipeline_mode<synchronous>, transform_indices = @transform_1, window_bounds = array<i64: 200, 128>}, {pipeline_mode = #tpu.pipeline_mode<synchronous>, transform_indices = @transform_2, window_bounds = array<i64: 1, 128>}, {transform_indices = @transform_3, window_bounds = array<i64: 8, 128>}]} {
    %c0 = arith.constant 0 : index
    %c0_0 = arith.constant 0 : index
    %c0_1 = arith.constant 0 : index
    %0 = vector.load %arg1[%c0, %c0_0, %c0_1] : memref<4x8x200xbf16, #tpu.memory_space<vmem>>, vector<4x8x200xbf16>
    %1 = vector.shape_cast %0 : vector<4x8x200xbf16> to vector<32x200xbf16>
    %c0_2 = arith.constant 0 : index
    %c0_3 = arith.constant 0 : index
    %2 = vector.load %arg2[%c0_2, %c0_3] : memref<200x128xbf16, #tpu.memory_space<vmem>>, vector<200x128xbf16>
    %cst = arith.constant dense<0.000000e+00> : vector<32x128xf32>
    %3 = tpu.matmul %1, %2, %cst {dimension_numbers = #tpu.dot_dimension_numbers<[1], [0], [0], [1], [0, 0, 1, 1], [], []>} : vector<32x200xbf16>, vector<200x128xbf16>, vector<32x128xf32> -> vector<32x128xf32>
    %4 = vector.shape_cast %3 : vector<32x128xf32> to vector<4x8x128xf32>
    %cst_4 = arith.constant dense<0xFF800000> : vector<8x128xf32>
    %5 = vector.multi_reduction <maximumf>, %4, %cst_4 [0] : vector<4x8x128xf32> to vector<8x128xf32>
    %c0_5 = arith.constant 0 : index
    %c0_6 = arith.constant 0 : index
    %6 = vector.load %arg3[%c0_5, %c0_6] : memref<1x128xf32, #tpu.memory_space<vmem>>, vector<1x128xf32>
    %7 = vector.broadcast %6 : vector<1x128xf32> to vector<8x128xf32>
    %8 = arith.addf %5, %7 : vector<8x128xf32>
    %cst_7 = arith.constant 0.000000e+00 : f32
    %9 = vector.broadcast %cst_7 : f32 to vector<8x128xf32>
    %10 = arith.maximumf %8, %9 : vector<8x128xf32>
    %c0_8 = arith.constant 0 : index
    %c0_9 = arith.constant 0 : index
    %11 = vector.load %arg4[%c0_8, %c0_9] : memref<8x128xf32, #tpu.memory_space<vmem>>, vector<8x128xf32>
    tpu.vector_store %arg4[%c0_8, %c0_9], %10 {strides = array<i32>} : memref<8x128xf32, #tpu.memory_space<vmem>>, vector<8x128xf32>,
    return
  }
  func.func @transform_0(%arg0: i32) -> (i32, i32, i32) {
    %c0_i32 = arith.constant 0 : i32
    %c0_i32_0 = arith.constant 0 : i32
    %c0_i32_1 = arith.constant 0 : i32
    return %c0_i32, %arg0, %c0_i32_0 : i32, i32, i32
  }
  func.func @transform_1(%arg0: i32) -> (i32, i32) {
    %c0_i32 = arith.constant 0 : i32
    %c0_i32_0 = arith.constant 0 : i32
    %c0_i32_1 = arith.constant 0 : i32
    return %c0_i32, %c0_i32_0 : i32, i32
  }
  func.func @transform_2(%arg0: i32) -> (i32, i32) {
    %c0_i32 = arith.constant 0 : i32
    %c0_i32_0 = arith.constant 0 : i32
    %c0_i32_1 = arith.constant 0 : i32
    return %c0_i32, %c0_i32_0 : i32, i32
  }
  func.func @transform_3(%arg0: i32) -> (i32, i32) {
    %c0_i32 = arith.constant 0 : i32
    %c0_i32_0 = arith.constant 0 : i32
    return %arg0, %c0_i32 : i32, i32
  }
}

module attributes {stable_mosaic.version = 11 : i64} {
  func.func @mlp_kernel(%arg0: i32, %arg1: memref<8x64xbf16, #tpu.memory_space<vmem>>, %arg2: memref<64x128xbf16, #tpu.memory_space<vmem>>, %arg3: memref<1x128xf32, #tpu.memory_space<vmem>>, %arg4: memref<128x256xbf16, #tpu.memory_space<vmem>>, %arg5: memref<1x256xf32, #tpu.memory_space<vmem>>, %arg6: memref<256x128xbf16, #tpu.memory_space<vmem>>, %arg7: memref<1x128xf32, #tpu.memory_space<vmem>>, %arg8: memref<8x128xf32, #tpu.memory_space<vmem>>) attributes {dimension_semantics = [#tpu.dimension_semantics<parallel>], iteration_bounds = array<i64: 1>, scalar_prefetch = 0 : i64, scratch_operands = 0 : i64, tpu.core_type = #tpu.core_type<tc>, window_params = [{transform_indices = @transform_0, window_bounds = array<i64: 8, 64>}, {pipeline_mode = #tpu.pipeline_mode<synchronous>, transform_indices = @transform_1, window_bounds = array<i64: 64, 128>}, {pipeline_mode = #tpu.pipeline_mode<synchronous>, transform_indices = @transform_2, window_bounds = array<i64: 1, 128>}, {pipeline_mode = #tpu.pipeline_mode<synchronous>, transform_indices = @transform_3, window_bounds = array<i64: 128, 256>}, {pipeline_mode = #tpu.pipeline_mode<synchronous>, transform_indices = @transform_4, window_bounds = array<i64: 1, 256>}, {pipeline_mode = #tpu.pipeline_mode<synchronous>, transform_indices = @transform_5, window_bounds = array<i64: 256, 128>}, {pipeline_mode = #tpu.pipeline_mode<synchronous>, transform_indices = @transform_6, window_bounds = array<i64: 1, 128>}, {transform_indices = @transform_7, window_bounds = array<i64: 8, 128>}]} {
    %c0 = arith.constant 0 : index
    %c0_0 = arith.constant 0 : index
    %0 = vector.load %arg1[%c0, %c0_0] : memref<8x64xbf16, #tpu.memory_space<vmem>>, vector<8x64xbf16>
    %c0_1 = arith.constant 0 : index
    %c0_2 = arith.constant 0 : index
    %1 = vector.load %arg2[%c0_1, %c0_2] : memref<64x128xbf16, #tpu.memory_space<vmem>>, vector<64x128xbf16>
    %cst = arith.constant dense<0.000000e+00> : vector<8x128xf32>
    %2 = tpu.matmul %0, %1, %cst {dimension_numbers = #tpu.dot_dimension_numbers<[1], [0], [0], [1], [0, 0, 1, 1], [], []>} : vector<8x64xbf16>, vector<64x128xbf16>, vector<8x128xf32> -> vector<8x128xf32>
    %c0_3 = arith.constant 0 : index
    %c0_4 = arith.constant 0 : index
    %3 = vector.load %arg3[%c0_3, %c0_4] : memref<1x128xf32, #tpu.memory_space<vmem>>, vector<1x128xf32>
    %4 = vector.broadcast %3 : vector<1x128xf32> to vector<8x128xf32>
    %5 = arith.addf %2, %4 : vector<8x128xf32>
    %cst_5 = arith.constant 0.000000e+00 : f32
    %6 = vector.broadcast %cst_5 : f32 to vector<8x128xf32>
    %7 = arith.maximumf %5, %6 : vector<8x128xf32>
    %8 = arith.truncf %7 : vector<8x128xf32> to vector<8x128xbf16>
    %c0_6 = arith.constant 0 : index
    %c0_7 = arith.constant 0 : index
    %9 = vector.load %arg4[%c0_6, %c0_7] : memref<128x256xbf16, #tpu.memory_space<vmem>>, vector<128x256xbf16>
    %cst_8 = arith.constant dense<0.000000e+00> : vector<8x256xf32>
    %10 = tpu.matmul %8, %9, %cst_8 {dimension_numbers = #tpu.dot_dimension_numbers<[1], [0], [0], [1], [0, 0, 1, 1], [], []>} : vector<8x128xbf16>, vector<128x256xbf16>, vector<8x256xf32> -> vector<8x256xf32>
    %c0_9 = arith.constant 0 : index
    %c0_10 = arith.constant 0 : index
    %11 = vector.load %arg5[%c0_9, %c0_10] : memref<1x256xf32, #tpu.memory_space<vmem>>, vector<1x256xf32>
    %12 = vector.broadcast %11 : vector<1x256xf32> to vector<8x256xf32>
    %13 = arith.addf %10, %12 : vector<8x256xf32>
    %cst_11 = arith.constant 0.000000e+00 : f32
    %14 = vector.broadcast %cst_11 : f32 to vector<8x256xf32>
    %15 = arith.maximumf %13, %14 : vector<8x256xf32>
    %16 = arith.truncf %15 : vector<8x256xf32> to vector<8x256xbf16>
    %c0_12 = arith.constant 0 : index
    %c0_13 = arith.constant 0 : index
    %17 = vector.load %arg6[%c0_12, %c0_13] : memref<256x128xbf16, #tpu.memory_space<vmem>>, vector<256x128xbf16>
    %cst_14 = arith.constant dense<0.000000e+00> : vector<8x128xf32>
    %18 = tpu.matmul %16, %17, %cst_14 {dimension_numbers = #tpu.dot_dimension_numbers<[1], [0], [0], [1], [0, 0, 1, 1], [], []>} : vector<8x256xbf16>, vector<256x128xbf16>, vector<8x128xf32> -> vector<8x128xf32>
    %c0_15 = arith.constant 0 : index
    %c0_16 = arith.constant 0 : index
    %19 = vector.load %arg7[%c0_15, %c0_16] : memref<1x128xf32, #tpu.memory_space<vmem>>, vector<1x128xf32>
    %20 = vector.broadcast %19 : vector<1x128xf32> to vector<8x128xf32>
    %21 = arith.addf %18, %20 : vector<8x128xf32>
    %c0_17 = arith.constant 0 : index
    %c0_18 = arith.constant 0 : index
    %22 = vector.load %arg8[%c0_17, %c0_18] : memref<8x128xf32, #tpu.memory_space<vmem>>, vector<8x128xf32>
    tpu.vector_store %arg8[%c0_17, %c0_18], %21 {strides = array<i32>} : memref<8x128xf32, #tpu.memory_space<vmem>>, vector<8x128xf32>,
    return
  }
  func.func @transform_0(%arg0: i32) -> (i32, i32) {
    %c0_i32 = arith.constant 0 : i32
    %c0_i32_0 = arith.constant 0 : i32
    return %arg0, %c0_i32 : i32, i32
  }
  func.func @transform_1(%arg0: i32) -> (i32, i32) {
    %c0_i32 = arith.constant 0 : i32
    %c0_i32_0 = arith.constant 0 : i32
    %c0_i32_1 = arith.constant 0 : i32
    return %c0_i32, %c0_i32_0 : i32, i32
  }
  func.func @transform_2(%arg0: i32) -> (i32, i32) {
    %c0_i32 = arith.constant 0 : i32
    %c0_i32_0 = arith.constant 0 : i32
    %c0_i32_1 = arith.constant 0 : i32
    return %c0_i32, %c0_i32_0 : i32, i32
  }
  func.func @transform_3(%arg0: i32) -> (i32, i32) {
    %c0_i32 = arith.constant 0 : i32
    %c0_i32_0 = arith.constant 0 : i32
    %c0_i32_1 = arith.constant 0 : i32
    return %c0_i32, %c0_i32_0 : i32, i32
  }
  func.func @transform_4(%arg0: i32) -> (i32, i32) {
    %c0_i32 = arith.constant 0 : i32
    %c0_i32_0 = arith.constant 0 : i32
    %c0_i32_1 = arith.constant 0 : i32
    return %c0_i32, %c0_i32_0 : i32, i32
  }
  func.func @transform_5(%arg0: i32) -> (i32, i32) {
    %c0_i32 = arith.constant 0 : i32
    %c0_i32_0 = arith.constant 0 : i32
    %c0_i32_1 = arith.constant 0 : i32
    return %c0_i32, %c0_i32_0 : i32, i32
  }
  func.func @transform_6(%arg0: i32) -> (i32, i32) {
    %c0_i32 = arith.constant 0 : i32
    %c0_i32_0 = arith.constant 0 : i32
    %c0_i32_1 = arith.constant 0 : i32
    return %c0_i32, %c0_i32_0 : i32, i32
  }
  func.func @transform_7(%arg0: i32) -> (i32, i32) {
    %c0_i32 = arith.constant 0 : i32
    %c0_i32_0 = arith.constant 0 : i32
    return %arg0, %c0_i32 : i32, i32
  }
}

</mosaic_0001>

<llo_original>
// kernel: tp1cnn_forward.4
$region0: #{tp1cnn_forward.4}
  #allocation0 [shape = 'u32[]', space=smem, size = 0x4, offset = 0x4, fixed_abs, tag = 'smem constant byte address 0x4 - core index']
  #allocation1 [shape = 'u32[144,128]{1,0:T(1,128)}', space=vmem, size = 0x12000, scoped, tag = 'internal scratch']
  %s0 = inlined_call_operand.vmem [shape: bf16[4,128,32], index: 0, kind: input, shape index: {}]
  %s1 = inlined_call_operand.vmem [shape: bf16[32,128], index: 1, kind: input, shape index: {}]
  %s2 = inlined_call_operand.vmem [shape: f32[1,128], index: 2, kind: input, shape index: {}]
  %s3 = inlined_call_operand.vmem [shape: f32[128,128], index: 3, kind: output, shape index: {}]
  %s4 = sld [smem:[#allocation0]]
  $region22: #{tp1cnn_forward.4} parent=0
    _
  %s6 = ssub.s32 1, %s4
  %s7 = scalar_select 0, %s6, %s4
  // Predicated region
  $region2: #{tp1cnn_forward.4} parent=0 // pred_check
    _
  $region3: #{tp1cnn_forward.4} parent=0 // pred_check_branch
    %9 = sbr.rel (0) target = $region5
  $region4: #{tp1cnn_forward.4} parent=0 // pred_region
    _
  $region5: #{tp1cnn_forward.4} parent=0 // pred_fallthru
    _
  // Predicated region
  $region6: #{tp1cnn_forward.4} parent=0 // pred_check
    _
  $region7: #{tp1cnn_forward.4} parent=0 // pred_check_branch
    %11 = sbr.rel (0) target = $region9
  $region8: #{tp1cnn_forward.4} parent=0 // pred_region
    _
  $region9: #{tp1cnn_forward.4} parent=0 // pred_fallthru
    _
  // Predicated region
  $region10: #{tp1cnn_forward.4} parent=0 // pred_check
    _
  $region11: #{tp1cnn_forward.4} parent=0 // pred_check_branch
    %13 = sbr.rel (0) target = $region13
  $region12: #{tp1cnn_forward.4} parent=0 // pred_region
    _
  $region13: #{tp1cnn_forward.4} parent=0 // pred_fallthru
    _
  %v15 = vld [vmem:[%s0] sm:$0xf]
  %v16 = vld [vmem:[%s0 + $0x4] sm:$0xf]
  %v17 = vld [vmem:[%s0 + $0x8] sm:$0xf]
  %v18 = vld [vmem:[%s0 + $0xc] sm:$0xf]
  %v19 = vld [vmem:[%s0 + $0x10] sm:$0xf]
  %v20 = vld [vmem:[%s0 + $0x14] sm:$0xf]
  %v21 = vld [vmem:[%s0 + $0x18] sm:$0xf]
  %v22 = vld [vmem:[%s0 + $0x1c] sm:$0xf]
  %v23 = vld [vmem:[%s0 + $0x20] sm:$0xf]
  %v24 = vld [vmem:[%s0 + $0x24] sm:$0xf]
  %v25 = vld [vmem:[%s0 + $0x28] sm:$0xf]
  %v26 = vld [vmem:[%s0 + $0x2c] sm:$0xf]
  %v27 = vld [vmem:[%s0 + $0x30] sm:$0xf]
  %v28 = vld [vmem:[%s0 + $0x34] sm:$0xf]
  %v29 = vld [vmem:[%s0 + $0x38] sm:$0xf]
  %v30 = vld [vmem:[%s0 + $0x3c] sm:$0xf]
  %v31 = vld [vmem:[%s0 + $0x40] sm:$0xf]
  %v32 = vld [vmem:[%s0 + $0x44] sm:$0xf]
  %v33 = vld [vmem:[%s0 + $0x48] sm:$0xf]
  %v34 = vld [vmem:[%s0 + $0x4c] sm:$0xf]
  %v35 = vld [vmem:[%s0 + $0x50] sm:$0xf]
  %v36 = vld [vmem:[%s0 + $0x54] sm:$0xf]
  %v37 = vld [vmem:[%s0 + $0x58] sm:$0xf]
  %v38 = vld [vmem:[%s0 + $0x5c] sm:$0xf]
  %v39 = vld [vmem:[%s0 + $0x60] sm:$0xf]
  %v40 = vld [vmem:[%s0 + $0x64] sm:$0xf]
  %v41 = vld [vmem:[%s0 + $0x68] sm:$0xf]
  %v42 = vld [vmem:[%s0 + $0x6c] sm:$0xf]
  %v43 = vld [vmem:[%s0 + $0x70] sm:$0xf]
  %v44 = vld [vmem:[%s0 + $0x74] sm:$0xf]
  %v45 = vld [vmem:[%s0 + $0x78] sm:$0xf]
  %v46 = vld [vmem:[%s0 + $0x7c] sm:$0xf]
  %v47 = vld [vmem:[%s0 + $0x80] sm:$0xf]
  %v48 = vld [vmem:[%s0 + $0x84] sm:$0xf]
  %v49 = vld [vmem:[%s0 + $0x88] sm:$0xf]
  %v50 = vld [vmem:[%s0 + $0x8c] sm:$0xf]
  %v51 = vld [vmem:[%s0 + $0x90] sm:$0xf]
  %v52 = vld [vmem:[%s0 + $0x94] sm:$0xf]
  %v53 = vld [vmem:[%s0 + $0x98] sm:$0xf]
  %v54 = vld [vmem:[%s0 + $0x9c] sm:$0xf]
  %v55 = vld [vmem:[%s0 + $0xa0] sm:$0xf]
  %v56 = vld [vmem:[%s0 + $0xa4] sm:$0xf]
  %v57 = vld [vmem:[%s0 + $0xa8] sm:$0xf]
  %v58 = vld [vmem:[%s0 + $0xac] sm:$0xf]
  %v59 = vld [vmem:[%s0 + $0xb0] sm:$0xf]
  %v60 = vld [vmem:[%s0 + $0xb4] sm:$0xf]
  %v61 = vld [vmem:[%s0 + $0xb8] sm:$0xf]
  %v62 = vld [vmem:[%s0 + $0xbc] sm:$0xf]
  %v63 = vld [vmem:[%s0 + $0xc0] sm:$0xf]
  %v64 = vld [vmem:[%s0 + $0xc4] sm:$0xf]
  %v65 = vld [vmem:[%s0 + $0xc8] sm:$0xf]
  %v66 = vld [vmem:[%s0 + $0xcc] sm:$0xf]
  %v67 = vld [vmem:[%s0 + $0xd0] sm:$0xf]
  %v68 = vld [vmem:[%s0 + $0xd4] sm:$0xf]
  %v69 = vld [vmem:[%s0 + $0xd8] sm:$0xf]
  %v70 = vld [vmem:[%s0 + $0xdc] sm:$0xf]
  %v71 = vld [vmem:[%s0 + $0xe0] sm:$0xf]
  %v72 = vld [vmem:[%s0 + $0xe4] sm:$0xf]
  %v73 = vld [vmem:[%s0 + $0xe8] sm:$0xf]
  %v74 = vld [vmem:[%s0 + $0xec] sm:$0xf]
  %v75 = vld [vmem:[%s0 + $0xf0] sm:$0xf]
  %v76 = vld [vmem:[%s0 + $0xf4] sm:$0xf]
  %v77 = vld [vmem:[%s0 + $0xf8] sm:$0xf]
  %v78 = vld [vmem:[%s0 + $0xfc] sm:$0xf]
  %v79 = vld [vmem:[%s1] sm:$0xf]
  %v80 = vld [vmem:[%s1 + $0x4] sm:$0xf]
  %v81 = vld [vmem:[%s1 + $0x8] sm:$0xf]
  %v82 = vld [vmem:[%s1 + $0xc] sm:$0xf]
  %v147 = vunpack.c.l.b16 %v15
  %v148 = vunpack.c.l.b16 %v16
  %v149 = vunpack.c.l.b16 %v17
  %v150 = vunpack.c.l.b16 %v18
  %v151 = vunpack.c.l.b16 %v19
  %v152 = vunpack.c.l.b16 %v20
  %v153 = vunpack.c.l.b16 %v21
  %v154 = vunpack.c.l.b16 %v22
  %v155 = vunpack.c.l.b16 %v23
  %v156 = vunpack.c.l.b16 %v24
  %v157 = vunpack.c.l.b16 %v25
  %v158 = vunpack.c.l.b16 %v26
  %v159 = vunpack.c.l.b16 %v27
  %v160 = vunpack.c.l.b16 %v28
  %v161 = vunpack.c.l.b16 %v29
  %v162 = vunpack.c.l.b16 %v30
  %v163 = vunpack.c.l.b16 %v31
  %v164 = vunpack.c.l.b16 %v32
  %v165 = vunpack.c.l.b16 %v33
  %v166 = vunpack.c.l.b16 %v34
  %v167 = vunpack.c.l.b16 %v35
  %v168 = vunpack.c.l.b16 %v36
  %v169 = vunpack.c.l.b16 %v37
  %v170 = vunpack.c.l.b16 %v38
  %v171 = vunpack.c.l.b16 %v39
  %v172 = vunpack.c.l.b16 %v40
  %v173 = vunpack.c.l.b16 %v41
  %v174 = vunpack.c.l.b16 %v42
  %v175 = vunpack.c.l.b16 %v43
  %v176 = vunpack.c.l.b16 %v44
  %v177 = vunpack.c.l.b16 %v45
  %v178 = vunpack.c.l.b16 %v46
  %v179 = vunpack.c.l.b16 %v47
  %v180 = vunpack.c.l.b16 %v48
  %v181 = vunpack.c.l.b16 %v49
  %v182 = vunpack.c.l.b16 %v50
  %v183 = vunpack.c.l.b16 %v51
  %v184 = vunpack.c.l.b16 %v52
  %v185 = vunpack.c.l.b16 %v53
  %v186 = vunpack.c.l.b16 %v54
  %v187 = vunpack.c.l.b16 %v55
  %v188 = vunpack.c.l.b16 %v56
  %v189 = vunpack.c.l.b16 %v57
  %v190 = vunpack.c.l.b16 %v58
  %v191 = vunpack.c.l.b16 %v59
  %v192 = vunpack.c.l.b16 %v60
  %v193 = vunpack.c.l.b16 %v61
  %v194 = vunpack.c.l.b16 %v62
  %v195 = vunpack.c.l.b16 %v63
  %v196 = vunpack.c.l.b16 %v64
  %v197 = vunpack.c.l.b16 %v65
  %v198 = vunpack.c.l.b16 %v66
  %v199 = vunpack.c.l.b16 %v67
  %v200 = vunpack.c.l.b16 %v68
  %v201 = vunpack.c.l.b16 %v69
  %v202 = vunpack.c.l.b16 %v70
  %v203 = vunpack.c.l.b16 %v71
  %v204 = vunpack.c.l.b16 %v72
  %v205 = vunpack.c.l.b16 %v73
  %v206 = vunpack.c.l.b16 %v74
  %v207 = vunpack.c.l.b16 %v75
  %v208 = vunpack.c.l.b16 %v76
  %v209 = vunpack.c.l.b16 %v77
  %v210 = vunpack.c.l.b16 %v78
  %v211 = vpack.c.b16 %v148, %v147
  %v212 = vpack.c.b16 %v150, %v149
  %v213 = vpack.c.b16 %v152, %v151
  %v214 = vpack.c.b16 %v154, %v153
  %v215 = vpack.c.b16 %v156, %v155
  %v216 = vpack.c.b16 %v158, %v157
  %v217 = vpack.c.b16 %v160, %v159
  %v218 = vpack.c.b16 %v162, %v161
  %v219 = vpack.c.b16 %v164, %v163
  %v220 = vpack.c.b16 %v166, %v165
  %v221 = vpack.c.b16 %v168, %v167
  %v222 = vpack.c.b16 %v170, %v169
  %v223 = vpack.c.b16 %v172, %v171
  %v224 = vpack.c.b16 %v174, %v173
  %v225 = vpack.c.b16 %v176, %v175
  %v226 = vpack.c.b16 %v178, %v177
  %v227 = vpack.c.b16 %v180, %v179
  %v228 = vpack.c.b16 %v182, %v181
  %v229 = vpack.c.b16 %v184, %v183
  %v230 = vpack.c.b16 %v186, %v185
  %v231 = vpack.c.b16 %v188, %v187
  %v232 = vpack.c.b16 %v190, %v189
  %v233 = vpack.c.b16 %v192, %v191
  %v234 = vpack.c.b16 %v194, %v193
  %v235 = vpack.c.b16 %v196, %v195
  %v236 = vpack.c.b16 %v198, %v197
  %v237 = vpack.c.b16 %v200, %v199
  %v238 = vpack.c.b16 %v202, %v201
  %v239 = vpack.c.b16 %v204, %v203
  %v240 = vpack.c.b16 %v206, %v205
  %v241 = vpack.c.b16 %v208, %v207
  %v242 = vpack.c.b16 %v210, %v209
  %v247 = vunpack.c.l.b16 %v79
  %v248 = vunpack.c.l.b16 %v80
  %v249 = vunpack.c.l.b16 %v81
  %v250 = vunpack.c.l.b16 %v82
  %v251 = vpack.c.b16 %v248, %v247
  %v252 = vpack.c.b16 %v250, %v249
  %vm255 = vcmask 261120
  %v257 = vsel %vm255, %v211, 0
  %v260 = vsel %vm255, %v212, 0
  %v263 = vsel %vm255, %v213, 0
  %v266 = vsel %vm255, %v214, 0
  %v269 = vsel %vm255, %v215, 0
  %v272 = vsel %vm255, %v216, 0
  %v275 = vsel %vm255, %v217, 0
  %v278 = vsel %vm255, %v218, 0
  %v281 = vsel %vm255, %v219, 0
  %v284 = vsel %vm255, %v220, 0
  %v287 = vsel %vm255, %v221, 0
  %v290 = vsel %vm255, %v222, 0
  %v293 = vsel %vm255, %v223, 0
  %v296 = vsel %vm255, %v224, 0
  %v299 = vsel %vm255, %v225, 0
  %v302 = vsel %vm255, %v226, 0
  %v305 = vsel %vm255, %v227, 0
  %v308 = vsel %vm255, %v228, 0
  %v311 = vsel %vm255, %v229, 0
  %v314 = vsel %vm255, %v230, 0
  %v317 = vsel %vm255, %v231, 0
  %v320 = vsel %vm255, %v232, 0
  %v323 = vsel %vm255, %v233, 0
  %v326 = vsel %vm255, %v234, 0
  %v329 = vsel %vm255, %v235, 0
  %v332 = vsel %vm255, %v236, 0
  %v335 = vsel %vm255, %v237, 0
  %v338 = vsel %vm255, %v238, 0
  %v341 = vsel %vm255, %v239, 0
  %v344 = vsel %vm255, %v240, 0
  %v347 = vsel %vm255, %v241, 0
  %v350 = vsel %vm255, %v242, 0
  %352 = vmatprep.subr.bf16.mxu0 0
  %353 = vmatpush1.bf16.msra.mxu0 %v251
  %354 = vmatprep.subr.bf16.mxu0 0
  %355 = vmatpush1.bf16.msra.mxu0 %v252
  %356 = vmatprep.subr.bf16.mxu0 0
  %357 = vmatpush1.bf16.msra.mxu0 0
  %358 = vmatprep.subr.bf16.mxu0 0
  %359 = vmatpush1.bf16.msra.mxu0 0
  %360 = vmatprep.subr.bf16.mxu0 0
  %361 = vmatpush1.bf16.msra.mxu0 0
  %362 = vmatprep.subr.bf16.mxu0 0
  %363 = vmatpush1.bf16.msra.mxu0 0
  %364 = vmatprep.subr.bf16.mxu0 0
  %365 = vmatpush1.bf16.msra.mxu0 0
  %366 = vmatprep.subr.bf16.mxu0 0
  %367 = vmatpush1.bf16.msra.mxu0 0
  %368 = vmatprep.subr.bf16.mxu0 0
  %369 = vmatpush1.bf16.msra.mxu0 0
  %370 = vmatprep.subr.bf16.mxu0 0
  %371 = vmatpush1.bf16.msra.mxu0 0
  %372 = vmatprep.subr.bf16.mxu0 0
  %373 = vmatpush1.bf16.msra.mxu0 0
  %374 = vmatprep.subr.bf16.mxu0 0
  %375 = vmatpush1.bf16.msra.mxu0 0
  %376 = vmatprep.subr.bf16.mxu0 0
  %377 = vmatpush1.bf16.msra.mxu0 0
  %378 = vmatprep.subr.bf16.mxu0 0
  %379 = vmatpush1.bf16.msra.mxu0 0
  %380 = vmatprep.subr.bf16.mxu0 0
  %381 = vmatpush1.bf16.msra.mxu0 0
  %382 = vmatprep.subr.bf16.mxu0 0
  %383 = vmatpush1.bf16.msra.mxu0 0
  %384 = vmatprep.mubr.bf16.mxu0 0
  %385 = vmatmul.mubr.bf16.gmra.mrb[0].mxu0 %v257
  %v386 = vpop.f32.mrb[0].mxu0
  %v387 = vadd.f32 0.0, %v386
  %v388 = vpop.f32.mrb[0].mxu0
  %v389 = vpop.f32.mrb[0].mxu0
  %v390 = vadd.f32 0.0, %v389
  %v391 = vpop.f32.mrb[0].mxu0
  %392 = vmatprep.mubr.bf16.mxu0 0
  %393 = vmatmul.mubr.bf16.gmra.mrb[0].mxu0 %v260
  %v394 = vpop.f32.mrb[0].mxu0
  %v395 = vadd.f32 0.0, %v394
  %v396 = vpop.f32.mrb[0].mxu0
  %v397 = vpop.f32.mrb[0].mxu0
  %v398 = vadd.f32 0.0, %v397
  %v399 = vpop.f32.mrb[0].mxu0
  %400 = vmatprep.mubr.bf16.mxu0 0
  %401 = vmatmul.mubr.bf16.gmra.mrb[0].mxu0 %v263
  %v402 = vpop.f32.mrb[0].mxu0
  %v403 = vadd.f32 0.0, %v402
  %v404 = vpop.f32.mrb[0].mxu0
  %v405 = vpop.f32.mrb[0].mxu0
  %v406 = vadd.f32 0.0, %v405
  %v407 = vpop.f32.mrb[0].mxu0
  %408 = vmatprep.mubr.bf16.mxu0 0
  %409 = vmatmul.mubr.bf16.gmra.mrb[0].mxu0 %v266
  %v410 = vpop.f32.mrb[0].mxu0
  %v411 = vadd.f32 0.0, %v410
  %v412 = vpop.f32.mrb[0].mxu0
  %v413 = vpop.f32.mrb[0].mxu0
  %v414 = vadd.f32 0.0, %v413
  %v415 = vpop.f32.mrb[0].mxu0
  %416 = vmatprep.mubr.bf16.mxu0 0
  %417 = vmatmul.mubr.bf16.gmra.mrb[0].mxu0 %v269
  %v418 = vpop.f32.mrb[0].mxu0
  %v419 = vadd.f32 0.0, %v418
  %v420 = vpop.f32.mrb[0].mxu0
  %v421 = vpop.f32.mrb[0].mxu0
  %v422 = vadd.f32 0.0, %v421
  %v423 = vpop.f32.mrb[0].mxu0
  %424 = vmatprep.mubr.bf16.mxu0 0
  %425 = vmatmul.mubr.bf16.gmra.mrb[0].mxu0 %v272
  %v426 = vpop.f32.mrb[0].mxu0
  %v427 = vadd.f32 0.0, %v426
  %v428 = vpop.f32.mrb[0].mxu0
  %v429 = vpop.f32.mrb[0].mxu0
  %v430 = vadd.f32 0.0, %v429
  %v431 = vpop.f32.mrb[0].mxu0
  %432 = vmatprep.mubr.bf16.mxu0 0
  %433 = vmatmul.mubr.bf16.gmra.mrb[0].mxu0 %v275
  %v434 = vpop.f32.mrb[0].mxu0
  %v435 = vadd.f32 0.0, %v434
  %v436 = vpop.f32.mrb[0].mxu0
  %v437 = vpop.f32.mrb[0].mxu0
  %v438 = vadd.f32 0.0, %v437
  %v439 = vpop.f32.mrb[0].mxu0
  %440 = vmatprep.mubr.bf16.mxu0 0
  %441 = vmatmul.mubr.bf16.gmra.mrb[0].mxu0 %v278
  %v442 = vpop.f32.mrb[0].mxu0
  %v443 = vadd.f32 0.0, %v442
  %v444 = vpop.f32.mrb[0].mxu0
  %v445 = vpop.f32.mrb[0].mxu0
  %v446 = vadd.f32 0.0, %v445
  %v447 = vpop.f32.mrb[0].mxu0
  %448 = vmatprep.mubr.bf16.mxu0 0
  %449 = vmatmul.mubr.bf16.gmra.mrb[0].mxu0 %v281
  %v450 = vpop.f32.mrb[0].mxu0
  %v451 = vadd.f32 0.0, %v450
  %v452 = vpop.f32.mrb[0].mxu0
  %v453 = vpop.f32.mrb[0].mxu0
  %v454 = vadd.f32 0.0, %v453
  %v455 = vpop.f32.mrb[0].mxu0
  %456 = vmatprep.mubr.bf16.mxu0 0
  %457 = vmatmul.mubr.bf16.gmra.mrb[0].mxu0 %v284
  %v458 = vpop.f32.mrb[0].mxu0
  %v459 = vadd.f32 0.0, %v458
  %v460 = vpop.f32.mrb[0].mxu0
  %v461 = vpop.f32.mrb[0].mxu0
  %v462 = vadd.f32 0.0, %v461
  %v463 = vpop.f32.mrb[0].mxu0
  %464 = vmatprep.mubr.bf16.mxu0 0
  %465 = vmatmul.mubr.bf16.gmra.mrb[0].mxu0 %v287
  %v466 = vpop.f32.mrb[0].mxu0
  %v467 = vadd.f32 0.0, %v466
  %v468 = vpop.f32.mrb[0].mxu0
  %v469 = vpop.f32.mrb[0].mxu0
  %v470 = vadd.f32 0.0, %v469
  %v471 = vpop.f32.mrb[0].mxu0
  %472 = vmatprep.mubr.bf16.mxu0 0
  %473 = vmatmul.mubr.bf16.gmra.mrb[0].mxu0 %v290
  %v474 = vpop.f32.mrb[0].mxu0
  %v475 = vadd.f32 0.0, %v474
  %v476 = vpop.f32.mrb[0].mxu0
  %v477 = vpop.f32.mrb[0].mxu0
  %v478 = vadd.f32 0.0, %v477
  %v479 = vpop.f32.mrb[0].mxu0
  %480 = vmatprep.mubr.bf16.mxu0 0
  %481 = vmatmul.mubr.bf16.gmra.mrb[0].mxu0 %v293
  %v482 = vpop.f32.mrb[0].mxu0
  %v483 = vadd.f32 0.0, %v482
  %v484 = vpop.f32.mrb[0].mxu0
  %v485 = vpop.f32.mrb[0].mxu0
  %v486 = vadd.f32 0.0, %v485
  %v487 = vpop.f32.mrb[0].mxu0
  %488 = vmatprep.mubr.bf16.mxu0 0
  %489 = vmatmul.mubr.bf16.gmra.mrb[0].mxu0 %v296
  %v490 = vpop.f32.mrb[0].mxu0
  %v491 = vadd.f32 0.0, %v490
  %v492 = vpop.f32.mrb[0].mxu0
  %v493 = vpop.f32.mrb[0].mxu0
  %v494 = vadd.f32 0.0, %v493
  %v495 = vpop.f32.mrb[0].mxu0
  %496 = vmatprep.mubr.bf16.mxu0 0
  %497 = vmatmul.mubr.bf16.gmra.mrb[0].mxu0 %v299
  %v498 = vpop.f32.mrb[0].mxu0
  %v499 = vadd.f32 0.0, %v498
  %v500 = vpop.f32.mrb[0].mxu0
  %v501 = vpop.f32.mrb[0].mxu0
  %v502 = vadd.f32 0.0, %v501
  %v503 = vpop.f32.mrb[0].mxu0
  %504 = vmatprep.mubr.bf16.mxu0 0
  %505 = vmatmul.mubr.bf16.gmra.mrb[0].mxu0 %v302
  %v506 = vpop.f32.mrb[0].mxu0
  %v507 = vadd.f32 0.0, %v506
  %v508 = vpop.f32.mrb[0].mxu0
  %v509 = vpop.f32.mrb[0].mxu0
  %v510 = vadd.f32 0.0, %v509
  %v511 = vpop.f32.mrb[0].mxu0
  %512 = vmatprep.mubr.bf16.mxu0 0
  %513 = vmatmul.mubr.bf16.gmra.mrb[0].mxu0 %v305
  %v514 = vpop.f32.mrb[0].mxu0
  %v515 = vadd.f32 0.0, %v514
  %v516 = vpop.f32.mrb[0].mxu0
  %v517 = vpop.f32.mrb[0].mxu0
  %v518 = vadd.f32 0.0, %v517
  %v519 = vpop.f32.mrb[0].mxu0
  %520 = vmatprep.mubr.bf16.mxu0 0
  %521 = vmatmul.mubr.bf16.gmra.mrb[0].mxu0 %v308
  %v522 = vpop.f32.mrb[0].mxu0
  %v523 = vadd.f32 0.0, %v522
  %v524 = vpop.f32.mrb[0].mxu0
  %v525 = vpop.f32.mrb[0].mxu0
  %v526 = vadd.f32 0.0, %v525
  %v527 = vpop.f32.mrb[0].mxu0
  %528 = vmatprep.mubr.bf16.mxu0 0
  %529 = vmatmul.mubr.bf16.gmra.mrb[0].mxu0 %v311
  %v530 = vpop.f32.mrb[0].mxu0
  %v531 = vadd.f32 0.0, %v530
  %v532 = vpop.f32.mrb[0].mxu0
  %v533 = vpop.f32.mrb[0].mxu0
  %v534 = vadd.f32 0.0, %v533
  %v535 = vpop.f32.mrb[0].mxu0
  %536 = vmatprep.mubr.bf16.mxu0 0
  %537 = vmatmul.mubr.bf16.gmra.mrb[0].mxu0 %v314
  %v538 = vpop.f32.mrb[0].mxu0
  %v539 = vadd.f32 0.0, %v538
  %v540 = vpop.f32.mrb[0].mxu0
  %v541 = vpop.f32.mrb[0].mxu0
  %v542 = vadd.f32 0.0, %v541
  %v543 = vpop.f32.mrb[0].mxu0
  %544 = vmatprep.mubr.bf16.mxu0 0
  %545 = vmatmul.mubr.bf16.gmra.mrb[0].mxu0 %v317
  %v546 = vpop.f32.mrb[0].mxu0
  %v547 = vadd.f32 0.0, %v546
  %v548 = vpop.f32.mrb[0].mxu0
  %v549 = vpop.f32.mrb[0].mxu0
  %v550 = vadd.f32 0.0, %v549
  %v551 = vpop.f32.mrb[0].mxu0
  %552 = vmatprep.mubr.bf16.mxu0 0
  %553 = vmatmul.mubr.bf16.gmra.mrb[0].mxu0 %v320
  %v554 = vpop.f32.mrb[0].mxu0
  %v555 = vadd.f32 0.0, %v554
  %v556 = vpop.f32.mrb[0].mxu0
  %v557 = vpop.f32.mrb[0].mxu0
  %v558 = vadd.f32 0.0, %v557
  %v559 = vpop.f32.mrb[0].mxu0
  %560 = vmatprep.mubr.bf16.mxu0 0
  %561 = vmatmul.mubr.bf16.gmra.mrb[0].mxu0 %v323
  %v562 = vpop.f32.mrb[0].mxu0
  %v563 = vadd.f32 0.0, %v562
  %v564 = vpop.f32.mrb[0].mxu0
  %v565 = vpop.f32.mrb[0].mxu0
  %v566 = vadd.f32 0.0, %v565
  %v567 = vpop.f32.mrb[0].mxu0
  %568 = vmatprep.mubr.bf16.mxu0 0
  %569 = vmatmul.mubr.bf16.gmra.mrb[0].mxu0 %v326
  %v570 = vpop.f32.mrb[0].mxu0
  %v571 = vadd.f32 0.0, %v570
  %v572 = vpop.f32.mrb[0].mxu0
  %v573 = vpop.f32.mrb[0].mxu0
  %v574 = vadd.f32 0.0, %v573
  %v575 = vpop.f32.mrb[0].mxu0
  %576 = vmatprep.mubr.bf16.mxu0 0
  %577 = vmatmul.mubr.bf16.gmra.mrb[0].mxu0 %v329
  %v578 = vpop.f32.mrb[0].mxu0
  %v579 = vadd.f32 0.0, %v578
  %v580 = vpop.f32.mrb[0].mxu0
  %v581 = vpop.f32.mrb[0].mxu0
  %v582 = vadd.f32 0.0, %v581
  %v583 = vpop.f32.mrb[0].mxu0
  %584 = vmatprep.mubr.bf16.mxu0 0
  %585 = vmatmul.mubr.bf16.gmra.mrb[0].mxu0 %v332
  %v586 = vpop.f32.mrb[0].mxu0
  %v587 = vadd.f32 0.0, %v586
  %v588 = vpop.f32.mrb[0].mxu0
  %v589 = vpop.f32.mrb[0].mxu0
  %v590 = vadd.f32 0.0, %v589
  %v591 = vpop.f32.mrb[0].mxu0
  %592 = vmatprep.mubr.bf16.mxu0 0
  %593 = vmatmul.mubr.bf16.gmra.mrb[0].mxu0 %v335
  %v594 = vpop.f32.mrb[0].mxu0
  %v595 = vadd.f32 0.0, %v594
  %v596 = vpop.f32.mrb[0].mxu0
  %v597 = vpop.f32.mrb[0].mxu0
  %v598 = vadd.f32 0.0, %v597
  %v599 = vpop.f32.mrb[0].mxu0
  %600 = vmatprep.mubr.bf16.mxu0 0
  %601 = vmatmul.mubr.bf16.gmra.mrb[0].mxu0 %v338
  %v602 = vpop.f32.mrb[0].mxu0
  %v603 = vadd.f32 0.0, %v602
  %v604 = vpop.f32.mrb[0].mxu0
  %v605 = vpop.f32.mrb[0].mxu0
  %v606 = vadd.f32 0.0, %v605
  %v607 = vpop.f32.mrb[0].mxu0
  %608 = vmatprep.mubr.bf16.mxu0 0
  %609 = vmatmul.mubr.bf16.gmra.mrb[0].mxu0 %v341
  %v610 = vpop.f32.mrb[0].mxu0
  %v611 = vadd.f32 0.0, %v610
  %v612 = vpop.f32.mrb[0].mxu0
  %v613 = vpop.f32.mrb[0].mxu0
  %v614 = vadd.f32 0.0, %v613
  %v615 = vpop.f32.mrb[0].mxu0
  %616 = vmatprep.mubr.bf16.mxu0 0
  %617 = vmatmul.mubr.bf16.gmra.mrb[0].mxu0 %v344
  %v618 = vpop.f32.mrb[0].mxu0
  %v619 = vadd.f32 0.0, %v618
  %v620 = vpop.f32.mrb[0].mxu0
  %v621 = vpop.f32.mrb[0].mxu0
  %v622 = vadd.f32 0.0, %v621
  %v623 = vpop.f32.mrb[0].mxu0
  %624 = vmatprep.mubr.bf16.mxu0 0
  %625 = vmatmul.mubr.bf16.gmra.mrb[0].mxu0 %v347
  %v626 = vpop.f32.mrb[0].mxu0
  %v627 = vadd.f32 0.0, %v626
  %v628 = vpop.f32.mrb[0].mxu0
  %v629 = vpop.f32.mrb[0].mxu0
  %v630 = vadd.f32 0.0, %v629
  %v631 = vpop.f32.mrb[0].mxu0
  %632 = vmatprep.mubr.bf16.mxu0 0
  %633 = vmatmul.mubr.bf16.gmra.mrb[0].mxu0 %v350
  %v634 = vpop.f32.mrb[0].mxu0
  %v635 = vadd.f32 0.0, %v634
  %v636 = vpop.f32.mrb[0].mxu0
  %v637 = vpop.f32.mrb[0].mxu0
  %v638 = vadd.f32 0.0, %v637
  %v639 = vpop.f32.mrb[0].mxu0
  %640 = vdwg.mxu0
  %v641 = vmax.f32 %v387, %v451
  %v642 = vmax.f32 %v641, %v515
  %v643 = vmax.f32 %v642, %v579
  %v644 = vmax.f32 %v390, %v454
  %v645 = vmax.f32 %v644, %v518
  %v646 = vmax.f32 %v645, %v582
  %v647 = vmax.f32 %v395, %v459
  %v648 = vmax.f32 %v647, %v523
  %v649 = vmax.f32 %v648, %v587
  %v650 = vmax.f32 %v398, %v462
  %v651 = vmax.f32 %v650, %v526
  %v652 = vmax.f32 %v651, %v590
  %v653 = vmax.f32 %v403, %v467
  %v654 = vmax.f32 %v653, %v531
  %v655 = vmax.f32 %v654, %v595
  %v656 = vmax.f32 %v406, %v470
  %v657 = vmax.f32 %v656, %v534
  %v658 = vmax.f32 %v657, %v598
  %v659 = vmax.f32 %v411, %v475
  %v660 = vmax.f32 %v659, %v539
  %v661 = vmax.f32 %v660, %v603
  %v662 = vmax.f32 %v414, %v478
  %v663 = vmax.f32 %v662, %v542
  %v664 = vmax.f32 %v663, %v606
  %v665 = vmax.f32 %v419, %v483
  %v666 = vmax.f32 %v665, %v547
  %v667 = vmax.f32 %v666, %v611
  %v668 = vmax.f32 %v422, %v486
  %v669 = vmax.f32 %v668, %v550
  %v670 = vmax.f32 %v669, %v614
  %v671 = vmax.f32 %v427, %v491
  %v672 = vmax.f32 %v671, %v555
  %v673 = vmax.f32 %v672, %v619
  %v674 = vmax.f32 %v430, %v494
  %v675 = vmax.f32 %v674, %v558
  %v676 = vmax.f32 %v675, %v622
  %v677 = vmax.f32 %v435, %v499
  %v678 = vmax.f32 %v677, %v563
  %v679 = vmax.f32 %v678, %v627
  %v680 = vmax.f32 %v438, %v502
  %v681 = vmax.f32 %v680, %v566
  %v682 = vmax.f32 %v681, %v630
  %v683 = vmax.f32 %v443, %v507
  %v684 = vmax.f32 %v683, %v571
  %v685 = vmax.f32 %v684, %v635
  %v686 = vmax.f32 %v446, %v510
  %v687 = vmax.f32 %v686, %v574
  %v688 = vmax.f32 %v687, %v638
  %v689 = vld [vmem:[%s2] sm:$0x1]
  %v691 = vlaneseq
  %v692 = vshrl.u32 %v691, 7
  %v693 = vsub.s32 0, %v692
  %v694 = vrot.slane %v689, %v693
  %v696 = vadd.f32 %v643, %v694
  %v697 = vadd.f32 %v646, %v694
  %v698 = vadd.f32 %v649, %v694
  %v699 = vadd.f32 %v652, %v694
  %v700 = vadd.f32 %v655, %v694
  %v701 = vadd.f32 %v658, %v694
  %v702 = vadd.f32 %v661, %v694
  %v703 = vadd.f32 %v664, %v694
  %v704 = vadd.f32 %v667, %v694
  %v705 = vadd.f32 %v670, %v694
  %v706 = vadd.f32 %v673, %v694
  %v707 = vadd.f32 %v676, %v694
  %v708 = vadd.f32 %v679, %v694
  %v709 = vadd.f32 %v682, %v694
  %v710 = vadd.f32 %v685, %v694
  %v711 = vadd.f32 %v688, %v694
  %v712 = vmax.f32 %v696, 0.0
  %v713 = vmax.f32 %v697, 0.0
  %v714 = vmax.f32 %v698, 0.0
  %v715 = vmax.f32 %v699, 0.0
  %v716 = vmax.f32 %v700, 0.0
  %v717 = vmax.f32 %v701, 0.0
  %v718 = vmax.f32 %v702, 0.0
  %v719 = vmax.f32 %v703, 0.0
  %v720 = vmax.f32 %v704, 0.0
  %v721 = vmax.f32 %v705, 0.0
  %v722 = vmax.f32 %v706, 0.0
  %v723 = vmax.f32 %v707, 0.0
  %v724 = vmax.f32 %v708, 0.0
  %v725 = vmax.f32 %v709, 0.0
  %v726 = vmax.f32 %v710, 0.0
  %v727 = vmax.f32 %v711, 0.0
  %728 = vst [vmem:[%s3] sm:$0xff] %v712
  %729 = vst [vmem:[%s3 + $0x8] sm:$0xff] %v713
  %730 = vst [vmem:[%s3 + $0x10] sm:$0xff] %v714
  %731 = vst [vmem:[%s3 + $0x18] sm:$0xff] %v715
  %732 = vst [vmem:[%s3 + $0x20] sm:$0xff] %v716
  %733 = vst [vmem:[%s3 + $0x28] sm:$0xff] %v717
  %734 = vst [vmem:[%s3 + $0x30] sm:$0xff] %v718
  %735 = vst [vmem:[%s3 + $0x38] sm:$0xff] %v719
  %736 = vst [vmem:[%s3 + $0x40] sm:$0xff] %v720
  %737 = vst [vmem:[%s3 + $0x48] sm:$0xff] %v721
  %738 = vst [vmem:[%s3 + $0x50] sm:$0xff] %v722
  %739 = vst [vmem:[%s3 + $0x58] sm:$0xff] %v723
  %740 = vst [vmem:[%s3 + $0x60] sm:$0xff] %v724
  %741 = vst [vmem:[%s3 + $0x68] sm:$0xff] %v725
  %742 = vst [vmem:[%s3 + $0x70] sm:$0xff] %v726
  %743 = vst [vmem:[%s3 + $0x78] sm:$0xff] %v727
  // Predicated region
  $region14: #{tp1cnn_forward.4} parent=0 // pred_check
    _
  $region15: #{tp1cnn_forward.4} parent=0 // pred_check_branch
    %745 = sbr.rel (0) target = $region17
  $region16: #{tp1cnn_forward.4} parent=0 // pred_region
    _
  $region17: #{tp1cnn_forward.4} parent=0 // pred_fallthru
    _
  // Predicated region
  $region18: #{tp1cnn_forward.4} parent=0 // pred_check
    _
  $region19: #{tp1cnn_forward.4} parent=0 // pred_check_branch
    %747 = sbr.rel (0) target = $region21
  $region20: #{tp1cnn_forward.4} parent=0 // pred_region
    _
  $region21: #{tp1cnn_forward.4} parent=0 // pred_fallthru
    _

// kernel: tp1cnn_forward.5
$region0: #{tp1cnn_forward.5}
  #allocation0 [shape = 'u32[]', space=smem, size = 0x4, offset = 0x4, fixed_abs, tag = 'smem constant byte address 0x4 - core index']
  #allocation1 [shape = 'u32[144,128]{1,0:T(1,128)}', space=vmem, size = 0x12000, scoped, tag = 'internal scratch']
  %s0 = inlined_call_operand.vmem [shape: bf16[4,32,104], index: 0, kind: input, shape index: {}]
  %s1 = inlined_call_operand.vmem [shape: bf16[104,128], index: 1, kind: input, shape index: {}]
  %s2 = inlined_call_operand.vmem [shape: f32[1,128], index: 2, kind: input, shape index: {}]
  %s3 = inlined_call_operand.vmem [shape: f32[32,128], index: 3, kind: output, shape index: {}]
  %s4 = sld [smem:[#allocation0]]
  $region22: #{tp1cnn_forward.5} parent=0
    _
  %s6 = ssub.s32 1, %s4
  %s7 = scalar_select 0, %s6, %s4
  // Predicated region
  $region2: #{tp1cnn_forward.5} parent=0 // pred_check
    _
  $region3: #{tp1cnn_forward.5} parent=0 // pred_check_branch
    %9 = sbr.rel (0) target = $region5
  $region4: #{tp1cnn_forward.5} parent=0 // pred_region
    _
  $region5: #{tp1cnn_forward.5} parent=0 // pred_fallthru
    _
  // Predicated region
  $region6: #{tp1cnn_forward.5} parent=0 // pred_check
    _
  $region7: #{tp1cnn_forward.5} parent=0 // pred_check_branch
    %11 = sbr.rel (0) target = $region9
  $region8: #{tp1cnn_forward.5} parent=0 // pred_region
    _
  $region9: #{tp1cnn_forward.5} parent=0 // pred_fallthru
    _
  // Predicated region
  $region10: #{tp1cnn_forward.5} parent=0 // pred_check
    _
  $region11: #{tp1cnn_forward.5} parent=0 // pred_check_branch
    %13 = sbr.rel (0) target = $region13
  $region12: #{tp1cnn_forward.5} parent=0 // pred_region
    _
  $region13: #{tp1cnn_forward.5} parent=0 // pred_fallthru
    _
  %v15 = vld [vmem:[%s0] sm:$0xf]
  %v16 = vld [vmem:[%s0 + $0x4] sm:$0xf]
  %v17 = vld [vmem:[%s0 + $0x8] sm:$0xf]
  %v18 = vld [vmem:[%s0 + $0xc] sm:$0xf]
  %v19 = vld [vmem:[%s0 + $0x10] sm:$0xf]
  %v20 = vld [vmem:[%s0 + $0x14] sm:$0xf]
  %v21 = vld [vmem:[%s0 + $0x18] sm:$0xf]
  %v22 = vld [vmem:[%s0 + $0x1c] sm:$0xf]
  %v23 = vld [vmem:[%s0 + $0x20] sm:$0xf]
  %v24 = vld [vmem:[%s0 + $0x24] sm:$0xf]
  %v25 = vld [vmem:[%s0 + $0x28] sm:$0xf]
  %v26 = vld [vmem:[%s0 + $0x2c] sm:$0xf]
  %v27 = vld [vmem:[%s0 + $0x30] sm:$0xf]
  %v28 = vld [vmem:[%s0 + $0x34] sm:$0xf]
  %v29 = vld [vmem:[%s0 + $0x38] sm:$0xf]
  %v30 = vld [vmem:[%s0 + $0x3c] sm:$0xf]
  %v31 = vld [vmem:[%s1] sm:$0xf]
  %v32 = vld [vmem:[%s1 + $0x4] sm:$0xf]
  %v33 = vld [vmem:[%s1 + $0x8] sm:$0xf]
  %v34 = vld [vmem:[%s1 + $0xc] sm:$0xf]
  %v35 = vld [vmem:[%s1 + $0x10] sm:$0xf]
  %v36 = vld [vmem:[%s1 + $0x14] sm:$0xf]
  %v37 = vld [vmem:[%s1 + $0x18] sm:$0xf]
  %v38 = vld [vmem:[%s1 + $0x1c] sm:$0xf]
  %v39 = vld [vmem:[%s1 + $0x20] sm:$0xf]
  %v40 = vld [vmem:[%s1 + $0x24] sm:$0xf]
  %v41 = vld [vmem:[%s1 + $0x28] sm:$0xf]
  %v42 = vld [vmem:[%s1 + $0x2c] sm:$0xf]
  %v43 = vld [vmem:[%s1 + $0x30] sm:$0xf]
  %v60 = vunpack.c.l.b16 %v15
  %v61 = vunpack.c.l.b16 %v16
  %v62 = vunpack.c.l.b16 %v17
  %v63 = vunpack.c.l.b16 %v18
  %v64 = vunpack.c.l.b16 %v19
  %v65 = vunpack.c.l.b16 %v20
  %v66 = vunpack.c.l.b16 %v21
  %v67 = vunpack.c.l.b16 %v22
  %v68 = vunpack.c.l.b16 %v23
  %v69 = vunpack.c.l.b16 %v24
  %v70 = vunpack.c.l.b16 %v25
  %v71 = vunpack.c.l.b16 %v26
  %v72 = vunpack.c.l.b16 %v27
  %v73 = vunpack.c.l.b16 %v28
  %v74 = vunpack.c.l.b16 %v29
  %v75 = vunpack.c.l.b16 %v30
  %v76 = vpack.c.b16 %v61, %v60
  %v77 = vpack.c.b16 %v63, %v62
  %v78 = vpack.c.b16 %v65, %v64
  %v79 = vpack.c.b16 %v67, %v66
  %v80 = vpack.c.b16 %v69, %v68
  %v81 = vpack.c.b16 %v71, %v70
  %v82 = vpack.c.b16 %v73, %v72
  %v83 = vpack.c.b16 %v75, %v74
  %v97 = vunpack.c.l.b16 %v31
  %v98 = vunpack.c.l.b16 %v32
  %v99 = vunpack.c.l.b16 %v33
  %v100 = vunpack.c.l.b16 %v34
  %v101 = vunpack.c.l.b16 %v35
  %v102 = vunpack.c.l.b16 %v36
  %v103 = vunpack.c.l.b16 %v37
  %v104 = vunpack.c.l.b16 %v38
  %v105 = vunpack.c.l.b16 %v39
  %v106 = vunpack.c.l.b16 %v40
  %v107 = vunpack.c.l.b16 %v41
  %v108 = vunpack.c.l.b16 %v42
  %v109 = vunpack.c.l.b16 %v43
  %v110 = vpack.c.b16 %v98, %v97
  %v111 = vpack.c.b16 %v100, %v99
  %v112 = vpack.c.b16 %v102, %v101
  %v113 = vpack.c.b16 %v104, %v103
  %v114 = vpack.c.b16 %v106, %v105
  %v115 = vpack.c.b16 %v108, %v107
  %v116 = vpack.c.b16 %v109, %v109
  %vm123 = vcmask 850944
  %v125 = vsel %vm123, %v76, 0
  %v128 = vsel %vm123, %v77, 0
  %v131 = vsel %vm123, %v78, 0
  %v134 = vsel %vm123, %v79, 0
  %v137 = vsel %vm123, %v80, 0
  %v140 = vsel %vm123, %v81, 0
  %v143 = vsel %vm123, %v82, 0
  %v146 = vsel %vm123, %v83, 0
  %vm148 = vcmask 1043456
  %v150 = vsel %vm148, %v116, 0
  %152 = vmatprep.subr.bf16.mxu0 0
  %153 = vmatpush1.bf16.msra.mxu0 %v110
  %154 = vmatprep.subr.bf16.mxu0 0
  %155 = vmatpush1.bf16.msra.mxu0 %v111
  %156 = vmatprep.subr.bf16.mxu0 0
  %157 = vmatpush1.bf16.msra.mxu0 %v112
  %158 = vmatprep.subr.bf16.mxu0 0
  %159 = vmatpush1.bf16.msra.mxu0 %v113
  %160 = vmatprep.subr.bf16.mxu0 0
  %161 = vmatpush1.bf16.msra.mxu0 %v114
  %162 = vmatprep.subr.bf16.mxu0 0
  %163 = vmatpush1.bf16.msra.mxu0 %v115
  %164 = vmatprep.subr.bf16.mxu0 0
  %165 = vmatpush1.bf16.msra.mxu0 %v150
  %166 = vmatprep.subr.bf16.mxu0 0
  %167 = vmatpush1.bf16.msra.mxu0 0
  %168 = vmatprep.subr.bf16.mxu0 0
  %169 = vmatpush1.bf16.msra.mxu0 0
  %170 = vmatprep.subr.bf16.mxu0 0
  %171 = vmatpush1.bf16.msra.mxu0 0
  %172 = vmatprep.subr.bf16.mxu0 0
  %173 = vmatpush1.bf16.msra.mxu0 0
  %174 = vmatprep.subr.bf16.mxu0 0
  %175 = vmatpush1.bf16.msra.mxu0 0
  %176 = vmatprep.subr.bf16.mxu0 0
  %177 = vmatpush1.bf16.msra.mxu0 0
  %178 = vmatprep.subr.bf16.mxu0 0
  %179 = vmatpush1.bf16.msra.mxu0 0
  %180 = vmatprep.subr.bf16.mxu0 0
  %181 = vmatpush1.bf16.msra.mxu0 0
  %182 = vmatprep.subr.bf16.mxu0 0
  %183 = vmatpush1.bf16.msra.mxu0 0
  %184 = vmatprep.mubr.bf16.mxu0 0
  %185 = vmatmul.mubr.bf16.gmra.mrb[0].mxu0 %v125
  %v186 = vpop.f32.mrb[0].mxu0
  %v187 = vadd.f32 0.0, %v186
  %v188 = vpop.f32.mrb[0].mxu0
  %v189 = vpop.f32.mrb[0].mxu0
  %v190 = vadd.f32 0.0, %v189
  %v191 = vpop.f32.mrb[0].mxu0
  %192 = vmatprep.mubr.bf16.mxu0 0
  %193 = vmatmul.mubr.bf16.gmra.mrb[0].mxu0 %v128
  %v194 = vpop.f32.mrb[0].mxu0
  %v195 = vadd.f32 0.0, %v194
  %v196 = vpop.f32.mrb[0].mxu0
  %v197 = vpop.f32.mrb[0].mxu0
  %v198 = vadd.f32 0.0, %v197
  %v199 = vpop.f32.mrb[0].mxu0
  %200 = vmatprep.mubr.bf16.mxu0 0
  %201 = vmatmul.mubr.bf16.gmra.mrb[0].mxu0 %v131
  %v202 = vpop.f32.mrb[0].mxu0
  %v203 = vadd.f32 0.0, %v202
  %v204 = vpop.f32.mrb[0].mxu0
  %v205 = vpop.f32.mrb[0].mxu0
  %v206 = vadd.f32 0.0, %v205
  %v207 = vpop.f32.mrb[0].mxu0
  %208 = vmatprep.mubr.bf16.mxu0 0
  %209 = vmatmul.mubr.bf16.gmra.mrb[0].mxu0 %v134
  %v210 = vpop.f32.mrb[0].mxu0
  %v211 = vadd.f32 0.0, %v210
  %v212 = vpop.f32.mrb[0].mxu0
  %v213 = vpop.f32.mrb[0].mxu0
  %v214 = vadd.f32 0.0, %v213
  %v215 = vpop.f32.mrb[0].mxu0
  %216 = vmatprep.mubr.bf16.mxu0 0
  %217 = vmatmul.mubr.bf16.gmra.mrb[0].mxu0 %v137
  %v218 = vpop.f32.mrb[0].mxu0
  %v219 = vadd.f32 0.0, %v218
  %v220 = vpop.f32.mrb[0].mxu0
  %v221 = vpop.f32.mrb[0].mxu0
  %v222 = vadd.f32 0.0, %v221
  %v223 = vpop.f32.mrb[0].mxu0
  %224 = vmatprep.mubr.bf16.mxu0 0
  %225 = vmatmul.mubr.bf16.gmra.mrb[0].mxu0 %v140
  %v226 = vpop.f32.mrb[0].mxu0
  %v227 = vadd.f32 0.0, %v226
  %v228 = vpop.f32.mrb[0].mxu0
  %v229 = vpop.f32.mrb[0].mxu0
  %v230 = vadd.f32 0.0, %v229
  %v231 = vpop.f32.mrb[0].mxu0
  %232 = vmatprep.mubr.bf16.mxu0 0
  %233 = vmatmul.mubr.bf16.gmra.mrb[0].mxu0 %v143
  %v234 = vpop.f32.mrb[0].mxu0
  %v235 = vadd.f32 0.0, %v234
  %v236 = vpop.f32.mrb[0].mxu0
  %v237 = vpop.f32.mrb[0].mxu0
  %v238 = vadd.f32 0.0, %v237
  %v239 = vpop.f32.mrb[0].mxu0
  %240 = vmatprep.mubr.bf16.mxu0 0
  %241 = vmatmul.mubr.bf16.gmra.mrb[0].mxu0 %v146
  %v242 = vpop.f32.mrb[0].mxu0
  %v243 = vadd.f32 0.0, %v242
  %v244 = vpop.f32.mrb[0].mxu0
  %v245 = vpop.f32.mrb[0].mxu0
  %v246 = vadd.f32 0.0, %v245
  %v247 = vpop.f32.mrb[0].mxu0
  %248 = vdwg.mxu0
  %v249 = vmax.f32 %v187, %v203
  %v250 = vmax.f32 %v249, %v219
  %v251 = vmax.f32 %v250, %v235
  %v252 = vmax.f32 %v190, %v206
  %v253 = vmax.f32 %v252, %v222
  %v254 = vmax.f32 %v253, %v238
  %v255 = vmax.f32 %v195, %v211
  %v256 = vmax.f32 %v255, %v227
  %v257 = vmax.f32 %v256, %v243
  %v258 = vmax.f32 %v198, %v214
  %v259 = vmax.f32 %v258, %v230
  %v260 = vmax.f32 %v259, %v246
  %v261 = vld [vmem:[%s2] sm:$0x1]
  %v263 = vlaneseq
  %v264 = vshrl.u32 %v263, 7
  %v265 = vsub.s32 0, %v264
  %v266 = vrot.slane %v261, %v265
  %v268 = vadd.f32 %v251, %v266
  %v269 = vadd.f32 %v254, %v266
  %v270 = vadd.f32 %v257, %v266
  %v271 = vadd.f32 %v260, %v266
  %v272 = vmax.f32 %v268, 0.0
  %v273 = vmax.f32 %v269, 0.0
  %v274 = vmax.f32 %v270, 0.0
  %v275 = vmax.f32 %v271, 0.0
  %276 = vst [vmem:[%s3] sm:$0xff] %v272
  %277 = vst [vmem:[%s3 + $0x8] sm:$0xff] %v273
  %278 = vst [vmem:[%s3 + $0x10] sm:$0xff] %v274
  %279 = vst [vmem:[%s3 + $0x18] sm:$0xff] %v275
  // Predicated region
  $region14: #{tp1cnn_forward.5} parent=0 // pred_check
    _
  $region15: #{tp1cnn_forward.5} parent=0 // pred_check_branch
    %281 = sbr.rel (0) target = $region17
  $region16: #{tp1cnn_forward.5} parent=0 // pred_region
    _
  $region17: #{tp1cnn_forward.5} parent=0 // pred_fallthru
    _
  // Predicated region
  $region18: #{tp1cnn_forward.5} parent=0 // pred_check
    _
  $region19: #{tp1cnn_forward.5} parent=0 // pred_check_branch
    %283 = sbr.rel (0) target = $region21
  $region20: #{tp1cnn_forward.5} parent=0 // pred_region
    _
  $region21: #{tp1cnn_forward.5} parent=0 // pred_fallthru
    _

// kernel: squeeze.0
$region0: #{squeeze.0}
  %s0 = inlined_call_operand.vmem [shape: bf16[2,2,2,200], index: 0, kind: input, shape index: {}]
  %s1 = inlined_call_operand.vmem [shape: bf16[1,8,200], index: 1, kind: output, shape index: {}]
  $region1: #{squeeze.0} parent=0
    #allocation0 [shape = 'u8[8192]{0}', space=vmem, size = 0x2000, scoped, tag = 'scoped mem for output reshape']
    #allocation1 [shape = 'u8[32768]{0}', space=vmem, size = 0x8000, scoped, tag = 'scoped mem for input reshape']
    %s3 = smul.u32 1, 2
    %s4 = sshllo.u32 0, %s3
    %s5 = smul.addr 1, 7
    %s6 = scalar_lea.vmem %s0, %s5
    %s7 = sshrl.u32 %s4, 1
    %s8 = sor.u32 %s4, %s7
    %s9 = sand.u32 %s8, 85
    %s10 = sshrl.u32 %s9, 1
    %s11 = sor.u32 %s9, %s10
    %s12 = sand.u32 51, %s11
    %s13 = sshrl.u32 %s12, 2
    %s14 = sor.u32 %s12, %s13
    %s15 = sand.u32 15, %s14
    %v16 = vld [vmem:[%s6] sm:%s15]
    %v17 = vunpack.c.l.bf16 %v16
    %v18 = vunpack.c.h.bf16 %v16
    %s19 = scalar_lea.vmem [#allocation1], 56
    %20 = vst [vmem:[%s19] sm:%s4] %v17
    %s21 = smul.addr 1, 6
    %s22 = scalar_lea.vmem %s0, %s21
    %s23 = sshrl.u32 %s4, 1
    %s24 = sor.u32 %s4, %s23
    %s25 = sand.u32 %s24, 85
    %s26 = sshrl.u32 %s25, 1
    %s27 = sor.u32 %s25, %s26
    %s28 = sand.u32 51, %s27
    %s29 = sshrl.u32 %s28, 2
    %s30 = sor.u32 %s28, %s29
    %s31 = sand.u32 15, %s30
    %v32 = vld [vmem:[%s22] sm:%s31]
    %v33 = vunpack.c.l.bf16 %v32
    %v34 = vunpack.c.h.bf16 %v32
    %s35 = scalar_lea.vmem [#allocation1], 48
    %36 = vst [vmem:[%s35] sm:%s4] %v33
    %s37 = smul.addr 1, 5
    %s38 = scalar_lea.vmem %s0, %s37
    %s39 = sshrl.u32 %s4, 1
    %s40 = sor.u32 %s4, %s39
    %s41 = sand.u32 %s40, 85
    %s42 = sshrl.u32 %s41, 1
    %s43 = sor.u32 %s41, %s42
    %s44 = sand.u32 51, %s43
    %s45 = sshrl.u32 %s44, 2
    %s46 = sor.u32 %s44, %s45
    %s47 = sand.u32 15, %s46
    %v48 = vld [vmem:[%s38] sm:%s47]
    %v49 = vunpack.c.l.bf16 %v48
    %v50 = vunpack.c.h.bf16 %v48
    %s51 = scalar_lea.vmem [#allocation1], 40
    %52 = vst [vmem:[%s51] sm:%s4] %v49
    %s53 = smul.addr 1, 4
    %s54 = scalar_lea.vmem %s0, %s53
    %s55 = sshrl.u32 %s4, 1
    %s56 = sor.u32 %s4, %s55
    %s57 = sand.u32 %s56, 85
    %s58 = sshrl.u32 %s57, 1
    %s59 = sor.u32 %s57, %s58
    %s60 = sand.u32 51, %s59
    %s61 = sshrl.u32 %s60, 2
    %s62 = sor.u32 %s60, %s61
    %s63 = sand.u32 15, %s62
    %v64 = vld [vmem:[%s54] sm:%s63]
    %v65 = vunpack.c.l.bf16 %v64
    %v66 = vunpack.c.h.bf16 %v64
    %s67 = scalar_lea.vmem [#allocation1], 32
    %68 = vst [vmem:[%s67] sm:%s4] %v65
    %s69 = smul.addr 1, 3
    %s70 = scalar_lea.vmem %s0, %s69
    %s71 = sshrl.u32 %s4, 1
    %s72 = sor.u32 %s4, %s71
    %s73 = sand.u32 %s72, 85
    %s74 = sshrl.u32 %s73, 1
    %s75 = sor.u32 %s73, %s74
    %s76 = sand.u32 51, %s75
    %s77 = sshrl.u32 %s76, 2
    %s78 = sor.u32 %s76, %s77
    %s79 = sand.u32 15, %s78
    %v80 = vld [vmem:[%s70] sm:%s79]
    %v81 = vunpack.c.l.bf16 %v80
    %v82 = vunpack.c.h.bf16 %v80
    %s83 = scalar_lea.vmem [#allocation1], 24
    %84 = vst [vmem:[%s83] sm:%s4] %v81
    %s85 = smul.addr 1, 2
    %s86 = scalar_lea.vmem %s0, %s85
    %s87 = sshrl.u32 %s4, 1
    %s88 = sor.u32 %s4, %s87
    %s89 = sand.u32 %s88, 85
    %s90 = sshrl.u32 %s89, 1
    %s91 = sor.u32 %s89, %s90
    %s92 = sand.u32 51, %s91
    %s93 = sshrl.u32 %s92, 2
    %s94 = sor.u32 %s92, %s93
    %s95 = sand.u32 15, %s94
    %v96 = vld [vmem:[%s86] sm:%s95]
    %v97 = vunpack.c.l.bf16 %v96
    %v98 = vunpack.c.h.bf16 %v96
    %s99 = scalar_lea.vmem [#allocation1], 16
    %100 = vst [vmem:[%s99] sm:%s4] %v97
    %s101 = scalar_lea.vmem %s0, 1
    %s102 = sshrl.u32 %s4, 1
    %s103 = sor.u32 %s4, %s102
    %s104 = sand.u32 %s103, 85
    %s105 = sshrl.u32 %s104, 1
    %s106 = sor.u32 %s104, %s105
    %s107 = sand.u32 51, %s106
    %s108 = sshrl.u32 %s107, 2
    %s109 = sor.u32 %s107, %s108
    %s110 = sand.u32 15, %s109
    %v111 = vld [vmem:[%s101] sm:%s110]
    %v112 = vunpack.c.l.bf16 %v111
    %v113 = vunpack.c.h.bf16 %v111
    %s114 = scalar_lea.vmem [#allocation1], 8
    %115 = vst [vmem:[%s114] sm:%s4] %v112
    %s116 = sshrl.u32 %s4, 1
    %s117 = sor.u32 %s4, %s116
    %s118 = sand.u32 %s117, 85
    %s119 = sshrl.u32 %s118, 1
    %s120 = sor.u32 %s118, %s119
    %s121 = sand.u32 51, %s120
    %s122 = sshrl.u32 %s121, 2
    %s123 = sor.u32 %s121, %s122
    %s124 = sand.u32 15, %s123
    %v125 = vld [vmem:[%s0] sm:%s124]
    %v126 = vunpack.c.l.bf16 %v125
    %v127 = vunpack.c.h.bf16 %v125
    %128 = vst [vmem:[#allocation1] sm:%s4] %v126
    %s129 = scalar_lea.vmem [#allocation1], 8
    %v130 = vld [vmem:[%s129] sm:$0x3]
    %vm131 = vcmask 588800
    %s132 = scalar_lea.vmem [#allocation0], 8
    %133 = vst.msk [vmem:[%s132] sm:$0x3] %vm131, %v130
    %s134 = scalar_lea.vmem [#allocation1], 24
    %v135 = vld [vmem:[%s134] sm:$0x3]
    %vm136 = vcmask 588800
    %s137 = scalar_lea.vmem [#allocation0], 10
    %138 = vst.msk [vmem:[%s137] sm:$0x3] %vm136, %v135
    %s139 = scalar_lea.vmem [#allocation1], 40
    %v140 = vld [vmem:[%s139] sm:$0x3]
    %vm141 = vcmask 588800
    %s142 = scalar_lea.vmem [#allocation0], 12
    %143 = vst.msk [vmem:[%s142] sm:$0x3] %vm141, %v140
    %s144 = scalar_lea.vmem [#allocation1], 56
    %v145 = vld [vmem:[%s144] sm:$0x3]
    %vm146 = vcmask 588800
    %s147 = scalar_lea.vmem [#allocation0], 14
    %148 = vst.msk [vmem:[%s147] sm:$0x3] %vm146, %v145
    %v149 = vld [vmem:[#allocation1] sm:$0x3]
    %150 = vst [vmem:[#allocation0] sm:$0x3] %v149
    %s151 = scalar_lea.vmem [#allocation1], 16
    %v152 = vld [vmem:[%s151] sm:$0x3]
    %s153 = scalar_lea.vmem [#allocation0], 2
    %154 = vst [vmem:[%s153] sm:$0x3] %v152
    %s155 = scalar_lea.vmem [#allocation1], 32
    %v156 = vld [vmem:[%s155] sm:$0x3]
    %s157 = scalar_lea.vmem [#allocation0], 4
    %158 = vst [vmem:[%s157] sm:$0x3] %v156
    %s159 = scalar_lea.vmem [#allocation1], 48
    %v160 = vld [vmem:[%s159] sm:$0x3]
    %s161 = scalar_lea.vmem [#allocation0], 6
    %162 = vst [vmem:[%s161] sm:$0x3] %v160
    %s164 = smul.u32 4, 2
    %s165 = sshllo.u32 0, %s164
    %s166 = sshrl.u32 %s164, 1
    %v167 = vld [vmem:[#allocation0] sm:%s165]
    %v168 = vpack.c.bf16 0.0, %v167
    %s169 = sshllo.u32 0, %s166
    %170 = vst [vmem:[%s1] sm:%s169] %v168
    %s171 = scalar_lea.vmem [#allocation0], 8
    %v172 = vld [vmem:[%s171] sm:%s165]
    %v173 = vpack.c.bf16 0.0, %v172
    %s174 = sshllo.u32 0, %s166
    %s175 = scalar_lea.vmem %s1, 4
    %176 = vst [vmem:[%s175] sm:%s174] %v173

// kernel: tp1cnn_forward.6
$region0: #{tp1cnn_forward.6}
  #allocation0 [shape = 'u32[]', space=smem, size = 0x4, offset = 0x4, fixed_abs, tag = 'smem constant byte address 0x4 - core index']
  #allocation1 [shape = 'u32[144,128]{1,0:T(1,128)}', space=vmem, size = 0x12000, scoped, tag = 'internal scratch']
  %s0 = inlined_call_operand.vmem [shape: bf16[4,8,200], index: 0, kind: input, shape index: {}]
  %s1 = inlined_call_operand.vmem [shape: bf16[200,128], index: 1, kind: input, shape index: {}]
  %s2 = inlined_call_operand.vmem [shape: f32[1,128], index: 2, kind: input, shape index: {}]
  %s3 = inlined_call_operand.vmem [shape: f32[8,128], index: 3, kind: output, shape index: {}]
  %s4 = sld [smem:[#allocation0]]
  $region22: #{tp1cnn_forward.6} parent=0
    _
  %s6 = ssub.s32 1, %s4
  %s7 = scalar_select 0, %s6, %s4
  // Predicated region
  $region2: #{tp1cnn_forward.6} parent=0 // pred_check
    _
  $region3: #{tp1cnn_forward.6} parent=0 // pred_check_branch
    %9 = sbr.rel (0) target = $region5
  $region4: #{tp1cnn_forward.6} parent=0 // pred_region
    _
  $region5: #{tp1cnn_forward.6} parent=0 // pred_fallthru
    _
  // Predicated region
  $region6: #{tp1cnn_forward.6} parent=0 // pred_check
    _
  $region7: #{tp1cnn_forward.6} parent=0 // pred_check_branch
    %11 = sbr.rel (0) target = $region9
  $region8: #{tp1cnn_forward.6} parent=0 // pred_region
    _
  $region9: #{tp1cnn_forward.6} parent=0 // pred_fallthru
    _
  // Predicated region
  $region10: #{tp1cnn_forward.6} parent=0 // pred_check
    _
  $region11: #{tp1cnn_forward.6} parent=0 // pred_check_branch
    %13 = sbr.rel (0) target = $region13
  $region12: #{tp1cnn_forward.6} parent=0 // pred_region
    _
  $region13: #{tp1cnn_forward.6} parent=0 // pred_fallthru
    _
  %v15 = vld [vmem:[%s0] sm:$0xff]
  %v16 = vld [vmem:[%s0 + $0x8] sm:$0xff]
  %v17 = vld [vmem:[%s0 + $0x10] sm:$0xff]
  %v18 = vld [vmem:[%s0 + $0x18] sm:$0xff]
  %v19 = vld [vmem:[%s1] sm:$0xf]
  %v20 = vld [vmem:[%s1 + $0x4] sm:$0xf]
  %v21 = vld [vmem:[%s1 + $0x8] sm:$0xf]
  %v22 = vld [vmem:[%s1 + $0xc] sm:$0xf]
  %v23 = vld [vmem:[%s1 + $0x10] sm:$0xf]
  %v24 = vld [vmem:[%s1 + $0x14] sm:$0xf]
  %v25 = vld [vmem:[%s1 + $0x18] sm:$0xf]
  %v26 = vld [vmem:[%s1 + $0x1c] sm:$0xf]
  %v27 = vld [vmem:[%s1 + $0x20] sm:$0xf]
  %v28 = vld [vmem:[%s1 + $0x24] sm:$0xf]
  %v29 = vld [vmem:[%s1 + $0x28] sm:$0xf]
  %v30 = vld [vmem:[%s1 + $0x2c] sm:$0xf]
  %v31 = vld [vmem:[%s1 + $0x30] sm:$0xf]
  %v32 = vld [vmem:[%s1 + $0x34] sm:$0xf]
  %v33 = vld [vmem:[%s1 + $0x38] sm:$0xf]
  %v34 = vld [vmem:[%s1 + $0x3c] sm:$0xf]
  %v35 = vld [vmem:[%s1 + $0x40] sm:$0xf]
  %v36 = vld [vmem:[%s1 + $0x44] sm:$0xf]
  %v37 = vld [vmem:[%s1 + $0x48] sm:$0xf]
  %v38 = vld [vmem:[%s1 + $0x4c] sm:$0xf]
  %v39 = vld [vmem:[%s1 + $0x50] sm:$0xf]
  %v40 = vld [vmem:[%s1 + $0x54] sm:$0xf]
  %v41 = vld [vmem:[%s1 + $0x58] sm:$0xf]
  %v42 = vld [vmem:[%s1 + $0x5c] sm:$0xf]
  %v43 = vld [vmem:[%s1 + $0x60] sm:$0xf]
  %v48 = vunpack.c.l.b16 %v15
  %v49 = vunpack.c.h.b16 %v15
  %v50 = vunpack.c.l.b16 %v16
  %v51 = vunpack.c.h.b16 %v16
  %v52 = vunpack.c.l.b16 %v17
  %v53 = vunpack.c.h.b16 %v17
  %v54 = vunpack.c.l.b16 %v18
  %v55 = vunpack.c.h.b16 %v18
  %v56 = vpack.c.b16 %v50, %v48
  %v57 = vpack.c.b16 %v51, %v49
  %v58 = vpack.c.b16 %v54, %v52
  %v59 = vpack.c.b16 %v55, %v53
  %v87 = vunpack.c.l.b16 %v19
  %v88 = vunpack.c.l.b16 %v20
  %v89 = vunpack.c.l.b16 %v21
  %v90 = vunpack.c.l.b16 %v22
  %v91 = vunpack.c.l.b16 %v23
  %v92 = vunpack.c.l.b16 %v24
  %v93 = vunpack.c.l.b16 %v25
  %v94 = vunpack.c.l.b16 %v26
  %v95 = vunpack.c.l.b16 %v27
  %v96 = vunpack.c.l.b16 %v28
  %v97 = vunpack.c.l.b16 %v29
  %v98 = vunpack.c.l.b16 %v30
  %v99 = vunpack.c.l.b16 %v31
  %v100 = vunpack.c.l.b16 %v32
  %v101 = vunpack.c.l.b16 %v33
  %v102 = vunpack.c.l.b16 %v34
  %v103 = vunpack.c.l.b16 %v35
  %v104 = vunpack.c.l.b16 %v36
  %v105 = vunpack.c.l.b16 %v37
  %v106 = vunpack.c.l.b16 %v38
  %v107 = vunpack.c.l.b16 %v39
  %v108 = vunpack.c.l.b16 %v40
  %v109 = vunpack.c.l.b16 %v41
  %v110 = vunpack.c.l.b16 %v42
  %v111 = vunpack.c.l.b16 %v43
  %v112 = vpack.c.b16 %v88, %v87
  %v113 = vpack.c.b16 %v90, %v89
  %v114 = vpack.c.b16 %v92, %v91
  %v115 = vpack.c.b16 %v94, %v93
  %v116 = vpack.c.b16 %v96, %v95
  %v117 = vpack.c.b16 %v98, %v97
  %v118 = vpack.c.b16 %v100, %v99
  %v119 = vpack.c.b16 %v102, %v101
  %v120 = vpack.c.b16 %v104, %v103
  %v121 = vpack.c.b16 %v106, %v105
  %v122 = vpack.c.b16 %v108, %v107
  %v123 = vpack.c.b16 %v110, %v109
  %v124 = vpack.c.b16 %v111, %v111
  %vm137 = vcmask 588800
  %v139 = vsel %vm137, %v57, 0
  %v142 = vsel %vm137, %v59, 0
  %vm144 = vcmask 1043456
  %v146 = vsel %vm144, %v124, 0
  %148 = vmatprep.subr.bf16.mxu0 0
  %149 = vmatpush1.bf16.msra.mxu0 %v112
  %150 = vmatprep.subr.bf16.mxu0 0
  %151 = vmatpush1.bf16.msra.mxu0 %v113
  %152 = vmatprep.subr.bf16.mxu0 0
  %153 = vmatpush1.bf16.msra.mxu0 %v114
  %154 = vmatprep.subr.bf16.mxu0 0
  %155 = vmatpush1.bf16.msra.mxu0 %v115
  %156 = vmatprep.subr.bf16.mxu0 0
  %157 = vmatpush1.bf16.msra.mxu0 %v116
  %158 = vmatprep.subr.bf16.mxu0 0
  %159 = vmatpush1.bf16.msra.mxu0 %v117
  %160 = vmatprep.subr.bf16.mxu0 0
  %161 = vmatpush1.bf16.msra.mxu0 %v118
  %162 = vmatprep.subr.bf16.mxu0 0
  %163 = vmatpush1.bf16.msra.mxu0 %v119
  %164 = vmatprep.subr.bf16.mxu0 0
  %165 = vmatpush1.bf16.msra.mxu0 %v120
  %166 = vmatprep.subr.bf16.mxu0 0
  %167 = vmatpush1.bf16.msra.mxu0 %v121
  %168 = vmatprep.subr.bf16.mxu0 0
  %169 = vmatpush1.bf16.msra.mxu0 %v122
  %170 = vmatprep.subr.bf16.mxu0 0
  %171 = vmatpush1.bf16.msra.mxu0 %v123
  %172 = vmatprep.subr.bf16.mxu0 0
  %173 = vmatpush1.bf16.msra.mxu0 %v146
  %174 = vmatprep.subr.bf16.mxu0 0
  %175 = vmatpush1.bf16.msra.mxu0 0
  %176 = vmatprep.subr.bf16.mxu0 0
  %177 = vmatpush1.bf16.msra.mxu0 0
  %178 = vmatprep.subr.bf16.mxu0 0
  %179 = vmatpush1.bf16.msra.mxu0 0
  %180 = vmatprep.mubr.bf16.mxu0 %v139
  %181 = vmatmul.mubr.bf16.gmra.mrb[0].mxu0 %v56
  %v182 = vpop.f32.mrb[0].mxu0
  %v183 = vadd.f32 0.0, %v182
  %v184 = vpop.f32.mrb[0].mxu0
  %v185 = vpop.f32.mrb[0].mxu0
  %v186 = vadd.f32 0.0, %v185
  %v187 = vpop.f32.mrb[0].mxu0
  %188 = vmatprep.mubr.bf16.mxu0 %v142
  %189 = vmatmul.mubr.bf16.gmra.mrb[0].mxu0 %v58
  %v190 = vpop.f32.mrb[0].mxu0
  %v191 = vadd.f32 0.0, %v190
  %v192 = vpop.f32.mrb[0].mxu0
  %v193 = vpop.f32.mrb[0].mxu0
  %v194 = vadd.f32 0.0, %v193
  %v195 = vpop.f32.mrb[0].mxu0
  %196 = vdwg.mxu0
  %v197 = vmax.f32 %v183, %v186
  %v198 = vmax.f32 %v191, %v194
  %v199 = vmax.f32 %v197, %v198
  %v200 = vld [vmem:[%s2] sm:$0x1]
  %v202 = vlaneseq
  %v203 = vshrl.u32 %v202, 7
  %v204 = vsub.s32 0, %v203
  %v205 = vrot.slane %v200, %v204
  %v207 = vadd.f32 %v199, %v205
  %v208 = vmax.f32 %v207, 0.0
  %209 = vst [vmem:[%s3] sm:$0xff] %v208
  // Predicated region
  $region14: #{tp1cnn_forward.6} parent=0 // pred_check
    _
  $region15: #{tp1cnn_forward.6} parent=0 // pred_check_branch
    %211 = sbr.rel (0) target = $region17
  $region16: #{tp1cnn_forward.6} parent=0 // pred_region
    _
  $region17: #{tp1cnn_forward.6} parent=0 // pred_fallthru
    _
  // Predicated region
  $region18: #{tp1cnn_forward.6} parent=0 // pred_check
    _
  $region19: #{tp1cnn_forward.6} parent=0 // pred_check_branch
    %213 = sbr.rel (0) target = $region21
  $region20: #{tp1cnn_forward.6} parent=0 // pred_region
    _
  $region21: #{tp1cnn_forward.6} parent=0 // pred_fallthru
    _

// kernel: tp1cnn_forward.7
$region0: #{tp1cnn_forward.7}
  #allocation0 [shape = 'u32[]', space=smem, size = 0x4, offset = 0x4, fixed_abs, tag = 'smem constant byte address 0x4 - core index']
  #allocation1 [shape = 'u32[144,128]{1,0:T(1,128)}', space=vmem, size = 0x12000, scoped, tag = 'internal scratch']
  %s0 = inlined_call_operand.vmem [shape: bf16[8,64], index: 0, kind: input, shape index: {}]
  %s1 = inlined_call_operand.vmem [shape: bf16[64,128], index: 1, kind: input, shape index: {}]
  %s2 = inlined_call_operand.vmem [shape: f32[1,128], index: 2, kind: input, shape index: {}]
  %s3 = inlined_call_operand.vmem [shape: bf16[128,256], index: 3, kind: input, shape index: {}]
  %s4 = inlined_call_operand.vmem [shape: f32[1,256], index: 4, kind: input, shape index: {}]
  %s5 = inlined_call_operand.vmem [shape: bf16[256,128], index: 5, kind: input, shape index: {}]
  %s6 = inlined_call_operand.vmem [shape: f32[1,128], index: 6, kind: input, shape index: {}]
  %s7 = inlined_call_operand.vmem [shape: f32[8,128], index: 7, kind: output, shape index: {}]
  %s8 = sld [smem:[#allocation0]]
  $region38: #{tp1cnn_forward.7} parent=0
    _
  %s10 = ssub.s32 1, %s8
  %s11 = scalar_select 0, %s10, %s8
  // Predicated region
  $region2: #{tp1cnn_forward.7} parent=0 // pred_check
    _
  $region3: #{tp1cnn_forward.7} parent=0 // pred_check_branch
    %13 = sbr.rel (0) target = $region5
  $region4: #{tp1cnn_forward.7} parent=0 // pred_region
    _
  $region5: #{tp1cnn_forward.7} parent=0 // pred_fallthru
    _
  // Predicated region
  $region6: #{tp1cnn_forward.7} parent=0 // pred_check
    _
  $region7: #{tp1cnn_forward.7} parent=0 // pred_check_branch
    %15 = sbr.rel (0) target = $region9
  $region8: #{tp1cnn_forward.7} parent=0 // pred_region
    _
  $region9: #{tp1cnn_forward.7} parent=0 // pred_fallthru
    _
  // Predicated region
  $region10: #{tp1cnn_forward.7} parent=0 // pred_check
    _
  $region11: #{tp1cnn_forward.7} parent=0 // pred_check_branch
    %17 = sbr.rel (0) target = $region13
  $region12: #{tp1cnn_forward.7} parent=0 // pred_region
    _
  $region13: #{tp1cnn_forward.7} parent=0 // pred_fallthru
    _
  // Predicated region
  $region14: #{tp1cnn_forward.7} parent=0 // pred_check
    _
  $region15: #{tp1cnn_forward.7} parent=0 // pred_check_branch
    %19 = sbr.rel (0) target = $region17
  $region16: #{tp1cnn_forward.7} parent=0 // pred_region
    _
  $region17: #{tp1cnn_forward.7} parent=0 // pred_fallthru
    _
  // Predicated region
  $region18: #{tp1cnn_forward.7} parent=0 // pred_check
    _
  $region19: #{tp1cnn_forward.7} parent=0 // pred_check_branch
    %21 = sbr.rel (0) target = $region21
  $region20: #{tp1cnn_forward.7} parent=0 // pred_region
    _
  $region21: #{tp1cnn_forward.7} parent=0 // pred_fallthru
    _
  // Predicated region
  $region22: #{tp1cnn_forward.7} parent=0 // pred_check
    _
  $region23: #{tp1cnn_forward.7} parent=0 // pred_check_branch
    %23 = sbr.rel (0) target = $region25
  $region24: #{tp1cnn_forward.7} parent=0 // pred_region
    _
  $region25: #{tp1cnn_forward.7} parent=0 // pred_fallthru
    _
  // Predicated region
  $region26: #{tp1cnn_forward.7} parent=0 // pred_check
    _
  $region27: #{tp1cnn_forward.7} parent=0 // pred_check_branch
    %25 = sbr.rel (0) target = $region29
  $region28: #{tp1cnn_forward.7} parent=0 // pred_region
    _
  $region29: #{tp1cnn_forward.7} parent=0 // pred_fallthru
    _
  %v27 = vld [vmem:[%s0] sm:$0xf]
  %v28 = vld [vmem:[%s1] sm:$0xf]
  %v29 = vld [vmem:[%s1 + $0x4] sm:$0xf]
  %v30 = vld [vmem:[%s1 + $0x8] sm:$0xf]
  %v31 = vld [vmem:[%s1 + $0xc] sm:$0xf]
  %v32 = vld [vmem:[%s1 + $0x10] sm:$0xf]
  %v33 = vld [vmem:[%s1 + $0x14] sm:$0xf]
  %v34 = vld [vmem:[%s1 + $0x18] sm:$0xf]
  %v35 = vld [vmem:[%s1 + $0x1c] sm:$0xf]
  %v36 = vld [vmem:[%s2] sm:$0x1]
  %v38 = vlaneseq
  %v39 = vshrl.u32 %v38, 7
  %v40 = vsub.s32 0, %v39
  %v41 = vrot.slane %v36, %v40
  %v51 = vunpack.c.l.b16 %v28
  %v52 = vunpack.c.l.b16 %v29
  %v53 = vunpack.c.l.b16 %v30
  %v54 = vunpack.c.l.b16 %v31
  %v55 = vunpack.c.l.b16 %v32
  %v56 = vunpack.c.l.b16 %v33
  %v57 = vunpack.c.l.b16 %v34
  %v58 = vunpack.c.l.b16 %v35
  %v59 = vpack.c.b16 %v52, %v51
  %v60 = vpack.c.b16 %v54, %v53
  %v61 = vpack.c.b16 %v56, %v55
  %v62 = vpack.c.b16 %v58, %v57
  %vm67 = vcmask 523264
  %v69 = vsel %vm67, %v27, 0
  %71 = vmatprep.subr.bf16.mxu0 0
  %72 = vmatpush1.bf16.msra.mxu0 %v59
  %73 = vmatprep.subr.bf16.mxu0 0
  %74 = vmatpush1.bf16.msra.mxu0 %v60
  %75 = vmatprep.subr.bf16.mxu0 0
  %76 = vmatpush1.bf16.msra.mxu0 %v61
  %77 = vmatprep.subr.bf16.mxu0 0
  %78 = vmatpush1.bf16.msra.mxu0 %v62
  %79 = vmatprep.subr.bf16.mxu0 0
  %80 = vmatpush1.bf16.msra.mxu0 0
  %81 = vmatprep.subr.bf16.mxu0 0
  %82 = vmatpush1.bf16.msra.mxu0 0
  %83 = vmatprep.subr.bf16.mxu0 0
  %84 = vmatpush1.bf16.msra.mxu0 0
  %85 = vmatprep.subr.bf16.mxu0 0
  %86 = vmatpush1.bf16.msra.mxu0 0
  %87 = vmatprep.subr.bf16.mxu0 0
  %88 = vmatpush1.bf16.msra.mxu0 0
  %89 = vmatprep.subr.bf16.mxu0 0
  %90 = vmatpush1.bf16.msra.mxu0 0
  %91 = vmatprep.subr.bf16.mxu0 0
  %92 = vmatpush1.bf16.msra.mxu0 0
  %93 = vmatprep.subr.bf16.mxu0 0
  %94 = vmatpush1.bf16.msra.mxu0 0
  %95 = vmatprep.subr.bf16.mxu0 0
  %96 = vmatpush1.bf16.msra.mxu0 0
  %97 = vmatprep.subr.bf16.mxu0 0
  %98 = vmatpush1.bf16.msra.mxu0 0
  %99 = vmatprep.subr.bf16.mxu0 0
  %100 = vmatpush1.bf16.msra.mxu0 0
  %101 = vmatprep.subr.bf16.mxu0 0
  %102 = vmatpush1.bf16.msra.mxu0 0
  %103 = vmatprep.mubr.bf16.mxu0 0
  %104 = vmatmul.mubr.bf16.gmra.mrb[0].mxu0 %v69
  %v105 = vpop.f32.mrb[0].mxu0
  %v106 = vadd.f32 %v41, %v105
  %v107 = vpop.f32.mrb[0].mxu0
  %v108 = vpop.f32.mrb[0].mxu0
  %v109 = vpop.f32.mrb[0].mxu0
  %110 = vdwg.mxu0
  %v111 = vmax.f32 %v106, 0.0
  %v112 = vpack.c.bf16 %v111, %v111
  %v113 = vld [vmem:[%s3] sm:$0xff]
  %v114 = vld [vmem:[%s3 + $0x8] sm:$0xff]
  %v115 = vld [vmem:[%s3 + $0x10] sm:$0xff]
  %v116 = vld [vmem:[%s3 + $0x18] sm:$0xff]
  %v117 = vld [vmem:[%s3 + $0x20] sm:$0xff]
  %v118 = vld [vmem:[%s3 + $0x28] sm:$0xff]
  %v119 = vld [vmem:[%s3 + $0x30] sm:$0xff]
  %v120 = vld [vmem:[%s3 + $0x38] sm:$0xff]
  %v121 = vld [vmem:[%s3 + $0x40] sm:$0xff]
  %v122 = vld [vmem:[%s3 + $0x48] sm:$0xff]
  %v123 = vld [vmem:[%s3 + $0x50] sm:$0xff]
  %v124 = vld [vmem:[%s3 + $0x58] sm:$0xff]
  %v125 = vld [vmem:[%s3 + $0x60] sm:$0xff]
  %v126 = vld [vmem:[%s3 + $0x68] sm:$0xff]
  %v127 = vld [vmem:[%s3 + $0x70] sm:$0xff]
  %v128 = vld [vmem:[%s3 + $0x78] sm:$0xff]
  %v129 = vld [vmem:[%s4] sm:$0x3]
  %v131 = vlaneseq
  %v132 = vshrl.u32 %v131, 7
  %v133 = vsub.s32 0, %v132
  %v134 = vrot.slane %v129, %v133
  %v135 = vlaneseq
  %v136 = vshrl.u32 %v135, 7
  %v137 = vsub.s32 1, %v136
  %v138 = vrot.slane %v129, %v137
  %v157 = vunpack.c.l.b16 %v113
  %v158 = vunpack.c.h.b16 %v113
  %v159 = vunpack.c.l.b16 %v114
  %v160 = vunpack.c.h.b16 %v114
  %v161 = vunpack.c.l.b16 %v115
  %v162 = vunpack.c.h.b16 %v115
  %v163 = vunpack.c.l.b16 %v116
  %v164 = vunpack.c.h.b16 %v116
  %v165 = vunpack.c.l.b16 %v117
  %v166 = vunpack.c.h.b16 %v117
  %v167 = vunpack.c.l.b16 %v118
  %v168 = vunpack.c.h.b16 %v118
  %v169 = vunpack.c.l.b16 %v119
  %v170 = vunpack.c.h.b16 %v119
  %v171 = vunpack.c.l.b16 %v120
  %v172 = vunpack.c.h.b16 %v120
  %v173 = vunpack.c.l.b16 %v121
  %v174 = vunpack.c.h.b16 %v121
  %v175 = vunpack.c.l.b16 %v122
  %v176 = vunpack.c.h.b16 %v122
  %v177 = vunpack.c.l.b16 %v123
  %v178 = vunpack.c.h.b16 %v123
  %v179 = vunpack.c.l.b16 %v124
  %v180 = vunpack.c.h.b16 %v124
  %v181 = vunpack.c.l.b16 %v125
  %v182 = vunpack.c.h.b16 %v125
  %v183 = vunpack.c.l.b16 %v126
  %v184 = vunpack.c.h.b16 %v126
  %v185 = vunpack.c.l.b16 %v127
  %v186 = vunpack.c.h.b16 %v127
  %v187 = vunpack.c.l.b16 %v128
  %v188 = vunpack.c.h.b16 %v128
  %v189 = vpack.c.b16 %v159, %v157
  %v190 = vpack.c.b16 %v160, %v158
  %v191 = vpack.c.b16 %v163, %v161
  %v192 = vpack.c.b16 %v164, %v162
  %v193 = vpack.c.b16 %v167, %v165
  %v194 = vpack.c.b16 %v168, %v166
  %v195 = vpack.c.b16 %v171, %v169
  %v196 = vpack.c.b16 %v172, %v170
  %v197 = vpack.c.b16 %v175, %v173
  %v198 = vpack.c.b16 %v176, %v174
  %v199 = vpack.c.b16 %v179, %v177
  %v200 = vpack.c.b16 %v180, %v178
  %v201 = vpack.c.b16 %v183, %v181
  %v202 = vpack.c.b16 %v184, %v182
  %v203 = vpack.c.b16 %v187, %v185
  %v204 = vpack.c.b16 %v188, %v186
  %221 = vmatprep.subr.bf16.mxu0 %v190
  %222 = vmatpush1.bf16.msra.mxu0 %v189
  %223 = vmatprep.subr.bf16.mxu0 %v192
  %224 = vmatpush1.bf16.msra.mxu0 %v191
  %225 = vmatprep.subr.bf16.mxu0 %v194
  %226 = vmatpush1.bf16.msra.mxu0 %v193
  %227 = vmatprep.subr.bf16.mxu0 %v196
  %228 = vmatpush1.bf16.msra.mxu0 %v195
  %229 = vmatprep.subr.bf16.mxu0 %v198
  %230 = vmatpush1.bf16.msra.mxu0 %v197
  %231 = vmatprep.subr.bf16.mxu0 %v200
  %232 = vmatpush1.bf16.msra.mxu0 %v199
  %233 = vmatprep.subr.bf16.mxu0 %v202
  %234 = vmatpush1.bf16.msra.mxu0 %v201
  %235 = vmatprep.subr.bf16.mxu0 %v204
  %236 = vmatpush1.bf16.msra.mxu0 %v203
  %237 = vmatprep.subr.bf16.mxu0 0
  %238 = vmatpush1.bf16.msra.mxu0 0
  %239 = vmatprep.subr.bf16.mxu0 0
  %240 = vmatpush1.bf16.msra.mxu0 0
  %241 = vmatprep.subr.bf16.mxu0 0
  %242 = vmatpush1.bf16.msra.mxu0 0
  %243 = vmatprep.subr.bf16.mxu0 0
  %244 = vmatpush1.bf16.msra.mxu0 0
  %245 = vmatprep.subr.bf16.mxu0 0
  %246 = vmatpush1.bf16.msra.mxu0 0
  %247 = vmatprep.subr.bf16.mxu0 0
  %248 = vmatpush1.bf16.msra.mxu0 0
  %249 = vmatprep.subr.bf16.mxu0 0
  %250 = vmatpush1.bf16.msra.mxu0 0
  %251 = vmatprep.subr.bf16.mxu0 0
  %252 = vmatpush1.bf16.msra.mxu0 0
  %253 = vmatprep.mubr.bf16.mxu0 0
  %254 = vmatmul.mubr.bf16.gmra.mrb[0].mxu0 %v112
  %v255 = vpop.f32.mrb[0].mxu0
  %v256 = vadd.f32 %v134, %v255
  %v257 = vpop.f32.mrb[0].mxu0
  %v258 = vadd.f32 %v138, %v257
  %v259 = vpop.f32.mrb[0].mxu0
  %v260 = vpop.f32.mrb[0].mxu0
  %261 = vdwg.mxu0
  %v262 = vmax.f32 %v256, 0.0
  %v263 = vmax.f32 %v258, 0.0
  %v264 = vpack.c.bf16 %v262, %v262
  %v265 = vpack.c.bf16 %v263, %v263
  %v266 = vld [vmem:[%s5] sm:$0xf]
  %v267 = vld [vmem:[%s5 + $0x4] sm:$0xf]
  %v268 = vld [vmem:[%s5 + $0x8] sm:$0xf]
  %v269 = vld [vmem:[%s5 + $0xc] sm:$0xf]
  %v270 = vld [vmem:[%s5 + $0x10] sm:$0xf]
  %v271 = vld [vmem:[%s5 + $0x14] sm:$0xf]
  %v272 = vld [vmem:[%s5 + $0x18] sm:$0xf]
  %v273 = vld [vmem:[%s5 + $0x1c] sm:$0xf]
  %v274 = vld [vmem:[%s5 + $0x20] sm:$0xf]
  %v275 = vld [vmem:[%s5 + $0x24] sm:$0xf]
  %v276 = vld [vmem:[%s5 + $0x28] sm:$0xf]
  %v277 = vld [vmem:[%s5 + $0x2c] sm:$0xf]
  %v278 = vld [vmem:[%s5 + $0x30] sm:$0xf]
  %v279 = vld [vmem:[%s5 + $0x34] sm:$0xf]
  %v280 = vld [vmem:[%s5 + $0x38] sm:$0xf]
  %v281 = vld [vmem:[%s5 + $0x3c] sm:$0xf]
  %v282 = vld [vmem:[%s5 + $0x40] sm:$0xf]
  %v283 = vld [vmem:[%s5 + $0x44] sm:$0xf]
  %v284 = vld [vmem:[%s5 + $0x48] sm:$0xf]
  %v285 = vld [vmem:[%s5 + $0x4c] sm:$0xf]
  %v286 = vld [vmem:[%s5 + $0x50] sm:$0xf]
  %v287 = vld [vmem:[%s5 + $0x54] sm:$0xf]
  %v288 = vld [vmem:[%s5 + $0x58] sm:$0xf]
  %v289 = vld [vmem:[%s5 + $0x5c] sm:$0xf]
  %v290 = vld [vmem:[%s5 + $0x60] sm:$0xf]
  %v291 = vld [vmem:[%s5 + $0x64] sm:$0xf]
  %v292 = vld [vmem:[%s5 + $0x68] sm:$0xf]
  %v293 = vld [vmem:[%s5 + $0x6c] sm:$0xf]
  %v294 = vld [vmem:[%s5 + $0x70] sm:$0xf]
  %v295 = vld [vmem:[%s5 + $0x74] sm:$0xf]
  %v296 = vld [vmem:[%s5 + $0x78] sm:$0xf]
  %v297 = vld [vmem:[%s5 + $0x7c] sm:$0xf]
  %v298 = vld [vmem:[%s6] sm:$0x1]
  %v300 = vlaneseq
  %v301 = vshrl.u32 %v300, 7
  %v302 = vsub.s32 0, %v301
  %v303 = vrot.slane %v298, %v302
  %v337 = vunpack.c.l.b16 %v266
  %v338 = vunpack.c.l.b16 %v267
  %v339 = vunpack.c.l.b16 %v268
  %v340 = vunpack.c.l.b16 %v269
  %v341 = vunpack.c.l.b16 %v270
  %v342 = vunpack.c.l.b16 %v271
  %v343 = vunpack.c.l.b16 %v272
  %v344 = vunpack.c.l.b16 %v273
  %v345 = vunpack.c.l.b16 %v274
  %v346 = vunpack.c.l.b16 %v275
  %v347 = vunpack.c.l.b16 %v276
  %v348 = vunpack.c.l.b16 %v277
  %v349 = vunpack.c.l.b16 %v278
  %v350 = vunpack.c.l.b16 %v279
  %v351 = vunpack.c.l.b16 %v280
  %v352 = vunpack.c.l.b16 %v281
  %v353 = vunpack.c.l.b16 %v282
  %v354 = vunpack.c.l.b16 %v283
  %v355 = vunpack.c.l.b16 %v284
  %v356 = vunpack.c.l.b16 %v285
  %v357 = vunpack.c.l.b16 %v286
  %v358 = vunpack.c.l.b16 %v287
  %v359 = vunpack.c.l.b16 %v288
  %v360 = vunpack.c.l.b16 %v289
  %v361 = vunpack.c.l.b16 %v290
  %v362 = vunpack.c.l.b16 %v291
  %v363 = vunpack.c.l.b16 %v292
  %v364 = vunpack.c.l.b16 %v293
  %v365 = vunpack.c.l.b16 %v294
  %v366 = vunpack.c.l.b16 %v295
  %v367 = vunpack.c.l.b16 %v296
  %v368 = vunpack.c.l.b16 %v297
  %v369 = vpack.c.b16 %v338, %v337
  %v370 = vpack.c.b16 %v340, %v339
  %v371 = vpack.c.b16 %v342, %v341
  %v372 = vpack.c.b16 %v344, %v343
  %v373 = vpack.c.b16 %v346, %v345
  %v374 = vpack.c.b16 %v348, %v347
  %v375 = vpack.c.b16 %v350, %v349
  %v376 = vpack.c.b16 %v352, %v351
  %v377 = vpack.c.b16 %v354, %v353
  %v378 = vpack.c.b16 %v356, %v355
  %v379 = vpack.c.b16 %v358, %v357
  %v380 = vpack.c.b16 %v360, %v359
  %v381 = vpack.c.b16 %v362, %v361
  %v382 = vpack.c.b16 %v364, %v363
  %v383 = vpack.c.b16 %v366, %v365
  %v384 = vpack.c.b16 %v368, %v367
  %401 = vmatprep.subr.bf16.mxu0 0
  %402 = vmatpush1.bf16.msra.mxu0 %v369
  %403 = vmatprep.subr.bf16.mxu0 0
  %404 = vmatpush1.bf16.msra.mxu0 %v370
  %405 = vmatprep.subr.bf16.mxu0 0
  %406 = vmatpush1.bf16.msra.mxu0 %v371
  %407 = vmatprep.subr.bf16.mxu0 0
  %408 = vmatpush1.bf16.msra.mxu0 %v372
  %409 = vmatprep.subr.bf16.mxu0 0
  %410 = vmatpush1.bf16.msra.mxu0 %v373
  %411 = vmatprep.subr.bf16.mxu0 0
  %412 = vmatpush1.bf16.msra.mxu0 %v374
  %413 = vmatprep.subr.bf16.mxu0 0
  %414 = vmatpush1.bf16.msra.mxu0 %v375
  %415 = vmatprep.subr.bf16.mxu0 0
  %416 = vmatpush1.bf16.msra.mxu0 %v376
  %417 = vmatprep.subr.bf16.mxu0 0
  %418 = vmatpush1.bf16.msra.mxu0 %v377
  %419 = vmatprep.subr.bf16.mxu0 0
  %420 = vmatpush1.bf16.msra.mxu0 %v378
  %421 = vmatprep.subr.bf16.mxu0 0
  %422 = vmatpush1.bf16.msra.mxu0 %v379
  %423 = vmatprep.subr.bf16.mxu0 0
  %424 = vmatpush1.bf16.msra.mxu0 %v380
  %425 = vmatprep.subr.bf16.mxu0 0
  %426 = vmatpush1.bf16.msra.mxu0 %v381
  %427 = vmatprep.subr.bf16.mxu0 0
  %428 = vmatpush1.bf16.msra.mxu0 %v382
  %429 = vmatprep.subr.bf16.mxu0 0
  %430 = vmatpush1.bf16.msra.mxu0 %v383
  %431 = vmatprep.subr.bf16.mxu0 0
  %432 = vmatpush1.bf16.msra.mxu0 %v384
  %433 = vmatprep.mubr.bf16.mxu0 %v265
  %434 = vmatmul.mubr.bf16.gmra.mrb[0].mxu0 %v264
  %v435 = vpop.f32.mrb[0].mxu0
  %v436 = vadd.f32 %v303, %v435
  %v437 = vpop.f32.mrb[0].mxu0
  %v438 = vpop.f32.mrb[0].mxu0
  %v439 = vpop.f32.mrb[0].mxu0
  %440 = vdwg.mxu0
  %441 = vst [vmem:[%s7] sm:$0xff] %v436
  // Predicated region
  $region30: #{tp1cnn_forward.7} parent=0 // pred_check
    _
  $region31: #{tp1cnn_forward.7} parent=0 // pred_check_branch
    %443 = sbr.rel (0) target = $region33
  $region32: #{tp1cnn_forward.7} parent=0 // pred_region
    _
  $region33: #{tp1cnn_forward.7} parent=0 // pred_fallthru
    _
  // Predicated region
  $region34: #{tp1cnn_forward.7} parent=0 // pred_check
    _
  $region35: #{tp1cnn_forward.7} parent=0 // pred_check_branch
    %445 = sbr.rel (0) target = $region37
  $region36: #{tp1cnn_forward.7} parent=0 // pred_region
    _
  $region37: #{tp1cnn_forward.7} parent=0 // pred_fallthru
    _

</llo_original>
